<compile_context>
chip_gen: v7x
topology: tpu7x:2x2x1
jax: 0.10.0
libtpu: 0.0.40
codegen_flags: <defaults>
</compile_context>

<pallas_src>
import jax
import jax.numpy as jnp
from jax.experimental import pallas as pl
from jax.experimental.pallas import tpu as pltpu


# ------------------------------ helpers --------------------------------------
def autopad(k, p=None, d=1):
    """Pad to 'same' shape outputs (mirrors the PyTorch helper)."""
    if d > 1:
        k = d * (k - 1) + 1 if isinstance(k, int) else [d * (x - 1) + 1 for x in k]
    if p is None:
        p = k // 2 if isinstance(k, int) else [x // 2 for x in k]
    return p


def _round_up(x, m):
    return (x + m - 1) // m * m


# ----------------------------- Pallas kernel ----------------------------------
def _make_conv_bn_silu_kernel(H, W, k, c1p, c2p):
    """Fused conv(k x k, s=1, 'same') + folded-BN + SiLU for one image."""
    hw = H * W

    def kernel(x_ref, w_ref, b_ref, o_ref):
        # x_ref: (1, Hp, Wp, c1p)  bf16  padded NHWC image (channels zero-padded)
        # w_ref: (k*k, c1p, c2p)   bf16  per-tap weights, BN scale folded in
        # b_ref: (1, c2p)          f32   folded BN bias
        # o_ref: (1, hw, c2p)      f32   lane-dense output slab
        x = x_ref[0]                                    # (Hp, Wp, c1p) bf16
        acc = jnp.zeros((hw, c2p), jnp.float32)
        # In-kernel im2col: unrolled loop over the k*k taps, each a shifted
        # view of the VMEM-resident image.  No patch matrix in HBM.
        for kh in range(k):
            for kw in range(k):
                xs = x[kh:kh + H, kw:kw + W, :].reshape(hw, c1p)   # bf16
                acc = acc + jnp.dot(
                    xs, w_ref[kh * k + kw],
                    preferred_element_type=jnp.float32)
        y = acc + b_ref[...]                            # folded BN bias
        o_ref[0] = y * jax.nn.sigmoid(y)                # SiLU

    return kernel


def _fused_conv_bn_silu(xp_bf16, w_taps, bias_row, H, W, k):
    """pallas_call wrapper: one grid step per image, batch axis parallel."""
    n, Hp, Wp, c1p = xp_bf16.shape
    c2p = w_taps.shape[-1]
    kernel = _make_conv_bn_silu_kernel(H, W, k, c1p, c2p)

    return pl.pallas_call(
        kernel,
        out_shape=jax.ShapeDtypeStruct((n, H * W, c2p), jnp.float32),
        grid_spec=pltpu.PrefetchScalarGridSpec(
            num_scalar_prefetch=0,
            grid=(n,),
            in_specs=[
                # one padded image per step; last two dims are full-extent.
                pl.BlockSpec((1, Hp, Wp, c1p), lambda i: (i, 0, 0, 0)),
                # full (tiny) weight stays resident across the grid.
                pl.BlockSpec((k * k, c1p, c2p), lambda i: (0, 0, 0)),
                pl.BlockSpec((1, c2p), lambda i: (0, 0)),
            ],
            out_specs=pl.BlockSpec((1, H * W, c2p), lambda i: (i, 0, 0)),
        ),
        compiler_params=pltpu.CompilerParams(
            dimension_semantics=("parallel",),
        ),
    )(xp_bf16, w_taps, bias_row)


# ------------------------------ Conv module -----------------------------------
class ConvPallas:
    """JAX/Pallas equivalent of the ultralytics `Conv` block (g=1, d=1, s=1)."""

    def __init__(self, c1, c2, k=3, s=1, p=None, key=None, eps=1e-5):
        assert s == 1, "stride 1 only in this synthetic kernel"
        assert k % 2 == 1, "odd kernel sizes only ('same' padding)"
        self.c1, self.c2, self.k = c1, c2, k
        self.pad = autopad(k, p, 1)
        self.eps = eps

        key = jax.random.PRNGKey(0) if key is None else key
        kw, _ = jax.random.split(key)

        # Conv2d weight, PyTorch layout [C2, C1, kH, kW], bias=False.
        fan_in = c1 * k * k
        bound = 1.0 / jnp.sqrt(fan_in)
        self.weight = jax.random.uniform(
            kw, (c2, c1, k, k), minval=-bound, maxval=bound, dtype=jnp.float32
        )

        # BatchNorm2d params (eval mode, deterministic "running" stats).
        self.gamma = 1.0 + 0.1 * jnp.arange(c2, dtype=jnp.float32)
        self.beta = 0.05 * jnp.arange(c2, dtype=jnp.float32)
        self.running_mean = 0.02 * jnp.arange(c2, dtype=jnp.float32)
        self.running_var = 1.0 + 0.03 * jnp.arange(c2, dtype=jnp.float32)

        # padded dims (sublane-aligned contraction, lane-dense output)
        self.c1p = _round_up(c1, 8)
        self.c2p = _round_up(c2, 128)

    def _folded_params(self):
        """Fold BN (eval) scale into the weights (f32), then cast to bf16."""
        scale = self.gamma / jnp.sqrt(self.running_var + self.eps)   # [C2]
        bias = self.beta - self.running_mean * scale                  # [C2]
        # [C2, C1, kh, kw] -> [kh, kw, C1, C2] -> [k*k, C1, C2]
        w_t = jnp.transpose(self.weight, (2, 3, 1, 0)).reshape(
            self.k * self.k, self.c1, self.c2
        )
        w_fold = w_t * scale[None, None, :]                           # fold in f32
        w_pad = jnp.pad(
            w_fold,
            ((0, 0), (0, self.c1p - self.c1), (0, self.c2p - self.c2)),
        ).astype(jnp.bfloat16)                                        # [k*k,c1p,c2p]
        b_pad = jnp.pad(bias, (0, self.c2p - self.c2)).reshape(
            1, self.c2p
        ).astype(jnp.float32)
        return w_pad, b_pad

    def __call__(self, x_nchw):
        n, c1, h, w = x_nchw.shape
        assert c1 == self.c1
        p = self.pad

        w_pad, b_pad = self._folded_params()

        # Single NCHW -> NHWC transpose (NHWC end-to-end would avoid it).
        x = jnp.transpose(x_nchw, (0, 2, 3, 1)).astype(jnp.bfloat16)
        xp = jnp.pad(x, ((0, 0), (p, p), (p, p), (0, self.c1p - c1)))

        out = _fused_conv_bn_silu(xp, w_pad, b_pad, h, w, self.k)  # [N,H*W,c2p] f32
        out = out[:, :, :self.c2].reshape(n, h, w, self.c2)
        return jnp.transpose(out, (0, 3, 1, 2))                    # back to NCHW


# --------------------------- reference (plain JAX) -----------------------------
def _reference(conv: ConvPallas, x_nchw):
    """Conv + folded-BN + SiLU at the same bf16 parameter/activation precision
    the kernel uses (f32 accumulation), so the check validates kernel math."""
    scale = conv.gamma / jnp.sqrt(conv.running_var + conv.eps)
    bias = conv.beta - conv.running_mean * scale
    w_fold = conv.weight * scale[:, None, None, None]            # [C2,C1,kh,kw]
    w_bf = w_fold.astype(jnp.bfloat16).astype(jnp.float32)
    x_bf = x_nchw.astype(jnp.bfloat16).astype(jnp.float32)
    y = jax.lax.conv_general_dilated(
        x_bf,
        w_bf,
        window_strides=(1, 1),
        padding=[(conv.pad, conv.pad), (conv.pad, conv.pad)],
        dimension_numbers=("NCHW", "OIHW", "NCHW"),
        precision=jax.lax.Precision.HIGHEST,
    )
    y = y + bias.reshape(1, -1, 1, 1)
    return y * jax.nn.sigmoid(y)


# ---------------------------------- main ---------------------------------------
if __name__ == "__main__":
    key = jax.random.PRNGKey(0)
    kx, kp = jax.random.split(key)

    N, C1, H, W = 2, 4, 16, 16
    C2, K = 8, 3

    x = jax.random.normal(kx, (N, C1, H, W), dtype=jnp.float32)

    conv = ConvPallas(C1, C2, k=K, key=kp)

    out = jax.block_until_ready(conv(x))
    ref = jax.block_until_ready(_reference(conv, x))

    assert out.shape == (N, C2, H, W), out.shape
    max_err = float(jnp.max(jnp.abs(out - ref)))
    assert jnp.allclose(out, ref, atol=1e-3, rtol=1e-3), max_err

    print("KERNEL_OK")
</pallas_src>

<mosaic_0001>
module attributes {stable_mosaic.version = 11 : i64} {
  func.func @kernel(%arg0: i32, %arg1: memref<1x18x18x8xbf16, #tpu.memory_space<vmem>>, %arg2: memref<9x8x128xbf16, #tpu.memory_space<vmem>>, %arg3: memref<1x128xf32, #tpu.memory_space<vmem>>, %arg4: memref<1x256x128xf32, #tpu.memory_space<vmem>>) attributes {dimension_semantics = [#tpu.dimension_semantics<parallel>], iteration_bounds = array<i64: 2>, scalar_prefetch = 0 : i64, scratch_operands = 0 : i64, tpu.core_type = #tpu.core_type<tc>, window_params = [{transform_indices = @transform_0, window_bounds = array<i64: 1, 18, 18, 8>}, {pipeline_mode = #tpu.pipeline_mode<synchronous>, transform_indices = @transform_1, window_bounds = array<i64: 9, 8, 128>}, {pipeline_mode = #tpu.pipeline_mode<synchronous>, transform_indices = @transform_2, window_bounds = array<i64: 1, 128>}, {transform_indices = @transform_3, window_bounds = array<i64: 1, 256, 128>}]} {
    %c0 = arith.constant 0 : index
    %c0_0 = arith.constant 0 : index
    %c0_1 = arith.constant 0 : index
    %c0_2 = arith.constant 0 : index
    %0 = vector.load %arg1[%c0, %c0_0, %c0_1, %c0_2] : memref<1x18x18x8xbf16, #tpu.memory_space<vmem>>, vector<1x18x18x8xbf16>
    %1 = vector.shape_cast %0 : vector<1x18x18x8xbf16> to vector<18x18x8xbf16>
    %cst = arith.constant 0.000000e+00 : f32
    %2 = vector.broadcast %cst : f32 to vector<256x128xf32>
    %3 = vector.extract_strided_slice %1 {offsets = [0, 0, 0], sizes = [16, 16, 8], strides = [1, 1, 1]} : vector<18x18x8xbf16> to vector<16x16x8xbf16>
    %4 = vector.shape_cast %3 : vector<16x16x8xbf16> to vector<256x8xbf16>
    %c0_3 = arith.constant 0 : index
    %c0_4 = arith.constant 0 : index
    %c0_5 = arith.constant 0 : index
    %5 = vector.load %arg2[%c0_3, %c0_4, %c0_5] : memref<9x8x128xbf16, #tpu.memory_space<vmem>>, vector<1x8x128xbf16>
    %6 = vector.shape_cast %5 : vector<1x8x128xbf16> to vector<8x128xbf16>
    %cst_6 = arith.constant dense<0.000000e+00> : vector<256x128xf32>
    %7 = tpu.matmul %4, %6, %cst_6 {dimension_numbers = #tpu.dot_dimension_numbers<[1], [0], [0], [1], [0, 0, 1, 1], [], []>} : vector<256x8xbf16>, vector<8x128xbf16>, vector<256x128xf32> -> vector<256x128xf32>
    %8 = arith.addf %2, %7 : vector<256x128xf32>
    %9 = vector.extract_strided_slice %1 {offsets = [0, 1, 0], sizes = [16, 16, 8], strides = [1, 1, 1]} : vector<18x18x8xbf16> to vector<16x16x8xbf16>
    %10 = vector.shape_cast %9 : vector<16x16x8xbf16> to vector<256x8xbf16>
    %c1 = arith.constant 1 : index
    %c0_7 = arith.constant 0 : index
    %c0_8 = arith.constant 0 : index
    %11 = vector.load %arg2[%c1, %c0_7, %c0_8] : memref<9x8x128xbf16, #tpu.memory_space<vmem>>, vector<1x8x128xbf16>
    %12 = vector.shape_cast %11 : vector<1x8x128xbf16> to vector<8x128xbf16>
    %cst_9 = arith.constant dense<0.000000e+00> : vector<256x128xf32>
    %13 = tpu.matmul %10, %12, %cst_9 {dimension_numbers = #tpu.dot_dimension_numbers<[1], [0], [0], [1], [0, 0, 1, 1], [], []>} : vector<256x8xbf16>, vector<8x128xbf16>, vector<256x128xf32> -> vector<256x128xf32>
    %14 = arith.addf %8, %13 : vector<256x128xf32>
    %15 = vector.extract_strided_slice %1 {offsets = [0, 2, 0], sizes = [16, 16, 8], strides = [1, 1, 1]} : vector<18x18x8xbf16> to vector<16x16x8xbf16>
    %16 = vector.shape_cast %15 : vector<16x16x8xbf16> to vector<256x8xbf16>
    %c2 = arith.constant 2 : index
    %c0_10 = arith.constant 0 : index
    %c0_11 = arith.constant 0 : index
    %17 = vector.load %arg2[%c2, %c0_10, %c0_11] : memref<9x8x128xbf16, #tpu.memory_space<vmem>>, vector<1x8x128xbf16>
    %18 = vector.shape_cast %17 : vector<1x8x128xbf16> to vector<8x128xbf16>
    %cst_12 = arith.constant dense<0.000000e+00> : vector<256x128xf32>
    %19 = tpu.matmul %16, %18, %cst_12 {dimension_numbers = #tpu.dot_dimension_numbers<[1], [0], [0], [1], [0, 0, 1, 1], [], []>} : vector<256x8xbf16>, vector<8x128xbf16>, vector<256x128xf32> -> vector<256x128xf32>
    %20 = arith.addf %14, %19 : vector<256x128xf32>
    %21 = vector.extract_strided_slice %1 {offsets = [1, 0, 0], sizes = [16, 16, 8], strides = [1, 1, 1]} : vector<18x18x8xbf16> to vector<16x16x8xbf16>
    %22 = vector.shape_cast %21 : vector<16x16x8xbf16> to vector<256x8xbf16>
    %c3 = arith.constant 3 : index
    %c0_13 = arith.constant 0 : index
    %c0_14 = arith.constant 0 : index
    %23 = vector.load %arg2[%c3, %c0_13, %c0_14] : memref<9x8x128xbf16, #tpu.memory_space<vmem>>, vector<1x8x128xbf16>
    %24 = vector.shape_cast %23 : vector<1x8x128xbf16> to vector<8x128xbf16>
    %cst_15 = arith.constant dense<0.000000e+00> : vector<256x128xf32>
    %25 = tpu.matmul %22, %24, %cst_15 {dimension_numbers = #tpu.dot_dimension_numbers<[1], [0], [0], [1], [0, 0, 1, 1], [], []>} : vector<256x8xbf16>, vector<8x128xbf16>, vector<256x128xf32> -> vector<256x128xf32>
    %26 = arith.addf %20, %25 : vector<256x128xf32>
    %27 = vector.extract_strided_slice %1 {offsets = [1, 1, 0], sizes = [16, 16, 8], strides = [1, 1, 1]} : vector<18x18x8xbf16> to vector<16x16x8xbf16>
    %28 = vector.shape_cast %27 : vector<16x16x8xbf16> to vector<256x8xbf16>
    %c4 = arith.constant 4 : index
    %c0_16 = arith.constant 0 : index
    %c0_17 = arith.constant 0 : index
    %29 = vector.load %arg2[%c4, %c0_16, %c0_17] : memref<9x8x128xbf16, #tpu.memory_space<vmem>>, vector<1x8x128xbf16>
    %30 = vector.shape_cast %29 : vector<1x8x128xbf16> to vector<8x128xbf16>
    %cst_18 = arith.constant dense<0.000000e+00> : vector<256x128xf32>
    %31 = tpu.matmul %28, %30, %cst_18 {dimension_numbers = #tpu.dot_dimension_numbers<[1], [0], [0], [1], [0, 0, 1, 1], [], []>} : vector<256x8xbf16>, vector<8x128xbf16>, vector<256x128xf32> -> vector<256x128xf32>
    %32 = arith.addf %26, %31 : vector<256x128xf32>
    %33 = vector.extract_strided_slice %1 {offsets = [1, 2, 0], sizes = [16, 16, 8], strides = [1, 1, 1]} : vector<18x18x8xbf16> to vector<16x16x8xbf16>
    %34 = vector.shape_cast %33 : vector<16x16x8xbf16> to vector<256x8xbf16>
    %c5 = arith.constant 5 : index
    %c0_19 = arith.constant 0 : index
    %c0_20 = arith.constant 0 : index
    %35 = vector.load %arg2[%c5, %c0_19, %c0_20] : memref<9x8x128xbf16, #tpu.memory_space<vmem>>, vector<1x8x128xbf16>
    %36 = vector.shape_cast %35 : vector<1x8x128xbf16> to vector<8x128xbf16>
    %cst_21 = arith.constant dense<0.000000e+00> : vector<256x128xf32>
    %37 = tpu.matmul %34, %36, %cst_21 {dimension_numbers = #tpu.dot_dimension_numbers<[1], [0], [0], [1], [0, 0, 1, 1], [], []>} : vector<256x8xbf16>, vector<8x128xbf16>, vector<256x128xf32> -> vector<256x128xf32>
    %38 = arith.addf %32, %37 : vector<256x128xf32>
    %39 = vector.extract_strided_slice %1 {offsets = [2, 0, 0], sizes = [16, 16, 8], strides = [1, 1, 1]} : vector<18x18x8xbf16> to vector<16x16x8xbf16>
    %40 = vector.shape_cast %39 : vector<16x16x8xbf16> to vector<256x8xbf16>
    %c6 = arith.constant 6 : index
    %c0_22 = arith.constant 0 : index
    %c0_23 = arith.constant 0 : index
    %41 = vector.load %arg2[%c6, %c0_22, %c0_23] : memref<9x8x128xbf16, #tpu.memory_space<vmem>>, vector<1x8x128xbf16>
    %42 = vector.shape_cast %41 : vector<1x8x128xbf16> to vector<8x128xbf16>
    %cst_24 = arith.constant dense<0.000000e+00> : vector<256x128xf32>
    %43 = tpu.matmul %40, %42, %cst_24 {dimension_numbers = #tpu.dot_dimension_numbers<[1], [0], [0], [1], [0, 0, 1, 1], [], []>} : vector<256x8xbf16>, vector<8x128xbf16>, vector<256x128xf32> -> vector<256x128xf32>
    %44 = arith.addf %38, %43 : vector<256x128xf32>
    %45 = vector.extract_strided_slice %1 {offsets = [2, 1, 0], sizes = [16, 16, 8], strides = [1, 1, 1]} : vector<18x18x8xbf16> to vector<16x16x8xbf16>
    %46 = vector.shape_cast %45 : vector<16x16x8xbf16> to vector<256x8xbf16>
    %c7 = arith.constant 7 : index
    %c0_25 = arith.constant 0 : index
    %c0_26 = arith.constant 0 : index
    %47 = vector.load %arg2[%c7, %c0_25, %c0_26] : memref<9x8x128xbf16, #tpu.memory_space<vmem>>, vector<1x8x128xbf16>
    %48 = vector.shape_cast %47 : vector<1x8x128xbf16> to vector<8x128xbf16>
    %cst_27 = arith.constant dense<0.000000e+00> : vector<256x128xf32>
    %49 = tpu.matmul %46, %48, %cst_27 {dimension_numbers = #tpu.dot_dimension_numbers<[1], [0], [0], [1], [0, 0, 1, 1], [], []>} : vector<256x8xbf16>, vector<8x128xbf16>, vector<256x128xf32> -> vector<256x128xf32>
    %50 = arith.addf %44, %49 : vector<256x128xf32>
    %51 = vector.extract_strided_slice %1 {offsets = [2, 2, 0], sizes = [16, 16, 8], strides = [1, 1, 1]} : vector<18x18x8xbf16> to vector<16x16x8xbf16>
    %52 = vector.shape_cast %51 : vector<16x16x8xbf16> to vector<256x8xbf16>
    %c8 = arith.constant 8 : index
    %c0_28 = arith.constant 0 : index
    %c0_29 = arith.constant 0 : index
    %53 = vector.load %arg2[%c8, %c0_28, %c0_29] : memref<9x8x128xbf16, #tpu.memory_space<vmem>>, vector<1x8x128xbf16>
    %54 = vector.shape_cast %53 : vector<1x8x128xbf16> to vector<8x128xbf16>
    %cst_30 = arith.constant dense<0.000000e+00> : vector<256x128xf32>
    %55 = tpu.matmul %52, %54, %cst_30 {dimension_numbers = #tpu.dot_dimension_numbers<[1], [0], [0], [1], [0, 0, 1, 1], [], []>} : vector<256x8xbf16>, vector<8x128xbf16>, vector<256x128xf32> -> vector<256x128xf32>
    %56 = arith.addf %50, %55 : vector<256x128xf32>
    %c0_31 = arith.constant 0 : index
    %c0_32 = arith.constant 0 : index
    %57 = vector.load %arg3[%c0_31, %c0_32] : memref<1x128xf32, #tpu.memory_space<vmem>>, vector<1x128xf32>
    %58 = vector.broadcast %57 : vector<1x128xf32> to vector<256x128xf32>
    %59 = arith.addf %56, %58 : vector<256x128xf32>
    %60 = arith.negf %59 : vector<256x128xf32>
    %61 = math.exp %60 : vector<256x128xf32>
    %cst_33 = arith.constant 1.000000e+00 : f32
    %62 = vector.broadcast %cst_33 : f32 to vector<256x128xf32>
    %63 = arith.addf %62, %61 : vector<256x128xf32>
    %64 = arith.divf %62, %63 : vector<256x128xf32>
    %65 = arith.mulf %59, %64 : vector<256x128xf32>
    %c0_34 = arith.constant 0 : index
    %c0_35 = arith.constant 0 : index
    %c0_36 = arith.constant 0 : index
    %66 = vector.load %arg4[%c0_34, %c0_35, %c0_36] : memref<1x256x128xf32, #tpu.memory_space<vmem>>, vector<1x256x128xf32>
    %67 = vector.shape_cast %66 : vector<1x256x128xf32> to vector<256x128xf32>
    %68 = vector.shape_cast %65 : vector<256x128xf32> to vector<1x256x128xf32>
    tpu.vector_store %arg4[%c0_34, %c0_35, %c0_36], %68 {strides = array<i32>} : memref<1x256x128xf32, #tpu.memory_space<vmem>>, vector<1x256x128xf32>,
    return
  }
  func.func @transform_0(%arg0: i32) -> (i32, i32, i32, i32) {
    %c0_i32 = arith.constant 0 : i32
    %c0_i32_0 = arith.constant 0 : i32
    %c0_i32_1 = arith.constant 0 : i32
    %c0_i32_2 = arith.constant 0 : i32
    return %arg0, %c0_i32, %c0_i32_0, %c0_i32_1 : i32, i32, i32, i32
  }
  func.func @transform_1(%arg0: i32) -> (i32, i32, i32) {
    %c0_i32 = arith.constant 0 : i32
    %c0_i32_0 = arith.constant 0 : i32
    %c0_i32_1 = arith.constant 0 : i32
    %c0_i32_2 = arith.constant 0 : i32
    return %c0_i32, %c0_i32_0, %c0_i32_1 : i32, i32, i32
  }
  func.func @transform_2(%arg0: i32) -> (i32, i32) {
    %c0_i32 = arith.constant 0 : i32
    %c0_i32_0 = arith.constant 0 : i32
    %c0_i32_1 = arith.constant 0 : i32
    return %c0_i32, %c0_i32_0 : i32, i32
  }
  func.func @transform_3(%arg0: i32) -> (i32, i32, i32) {
    %c0_i32 = arith.constant 0 : i32
    %c0_i32_0 = arith.constant 0 : i32
    %c0_i32_1 = arith.constant 0 : i32
    return %arg0, %c0_i32, %c0_i32_0 : i32, i32, i32
  }
}

</mosaic_0001>

<llo_original>
// kernel: tpu_custom_call.1
$region0: #{tpu_custom_call.1}
  #allocation0 [shape = 'u32[]', space=smem, size = 0x4, offset = 0x4, fixed_abs, tag = 'smem constant byte address 0x4 - core index']
  #allocation1 [shape = 'u32[144,128]{1,0:T(1,128)}', space=vmem, size = 0x12000, scoped, tag = 'internal scratch']
  %s0 = inlined_call_operand.vmem [shape: bf16[2,18,18,8], index: 0, kind: input, shape index: {}]
  %s1 = inlined_call_operand.vmem [shape: bf16[9,8,128], index: 1, kind: input, shape index: {}]
  %s2 = inlined_call_operand.vmem [shape: f32[1,128], index: 2, kind: input, shape index: {}]
  %s3 = inlined_call_operand.hbm [shape: f32[2,256,128], index: 3, kind: output, shape index: {}]
  %s4 = sld [smem:[#allocation0]]
  $region45: #{tpu_custom_call.1} parent=0
    _
  %s6 = ssub.s32 1, %s4
  %s7 = scalar_select 0, %s6, %s4
  $region1: #{tpu_custom_call.1} parent=0
    #allocation2 [shape = 'u8[262144]{0}', space=vmem, size = 0x40000, scoped, tag = 'output window, operand 0']
    #allocation3 [shape = 's32[2]{0}', space=sflag, size = 0x8, scoped, tag = 'scoped memory for tpu_custom_call.1']
    %8 = vsyncpa [#allocation3], 0
    %s9 = scalar_lea.sflag [#allocation3], 1
    %10 = vsyncpa %s9, 0
    loop: start=0, step=1, limit=4
    $region2: #{tpu_custom_call.1} parent=1 // loop_pre_header
      _
    $region3: #{tpu_custom_call.1} parent=1 // loop_header
      %s12 = sphi 0, %s16
      %p13 = scmp.ge.s32.totalorder %s12, 4
      %s22 = sphi 0, %s24
      %s25 = sphi 0, %s22
      %s26 = sphi 0, %s25
      %s42 = sphi 0, %s26
      %s46 = sphi 0, %s46
      %s48 = sphi 0, %s46
      %s49 = sphi 0, %s48
      %s63 = sphi 0, %s49
      %s67 = sphi 0, %s67
      %s69 = sphi 0, %s67
      %s70 = sphi 0, %s69
      %s84 = sphi 0, %s70
      %s90 = sphi 0, %s92
      %s93 = sphi 0, %s90
      %s94 = sphi 0, %s93
      %s110 = sphi 0, %s94
    $region4: #{tpu_custom_call.1} parent=1 // loop_header_branch
      %15 = sbr.rel (%p13) target = $region8
    $region5: #{tpu_custom_call.1} parent=1 // loop_body
      %s17 = ssub.s32 %s12, 1
      %s18 = ssub.s32 %s12, 2
      %s19 = sadd.s32 %s12, 1
      %s20 = ssub.s32 %s12, %s19
      %p21 = scmp.eq.s32.totalorder %s20, 0
      %s23 = sadd.s32 %s22, 1
      %s24 = scalar_select %p21, %s22, %s23
      %p27 = pneg %p21
      %p28 = scmp.eq.s32.totalorder %s12, 1
      %p29 = por %p27, %p28
      %p30 = scmp.ne.s32.totalorder %s22, %s25
      %p31 = scmp.eq.s32.totalorder %s12, 0
      %p32 = por %p30, %p31
      %p33 = scmp.ne.s32.totalorder %s22, %s25
      %p34 = scmp.eq.s32.totalorder %s17, 1
      %p35 = por %p33, %p34
      %p36 = scmp.ne.s32.totalorder %s25, %s26
      %p37 = scmp.eq.s32.totalorder %s17, 0
      %p38 = por %p36, %p37
      %p39 = scmp.ne.s32.totalorder %s25, %s26
      %p40 = scmp.eq.s32.totalorder %s18, 1
      %p41 = por %p39, %p40
      %p43 = scmp.ne.s32.totalorder %s26, %s42
      %p44 = scmp.eq.s32.totalorder %s18, 0
      %p45 = por %p43, %p44
      %s47 = sadd.s32 %s46, 1
      %p50 = scmp.eq.s32.totalorder %s12, 1
      %p51 = scmp.ne.s32.totalorder %s46, %s48
      %p52 = scmp.eq.s32.totalorder %s12, 0
      %p53 = por %p51, %p52
      %p54 = scmp.ne.s32.totalorder %s46, %s48
      %p55 = scmp.eq.s32.totalorder %s17, 1
      %p56 = por %p54, %p55
      %p57 = scmp.ne.s32.totalorder %s48, %s49
      %p58 = scmp.eq.s32.totalorder %s17, 0
      %p59 = por %p57, %p58
      %p60 = scmp.ne.s32.totalorder %s48, %s49
      %p61 = scmp.eq.s32.totalorder %s18, 1
      %p62 = por %p60, %p61
      %p64 = scmp.ne.s32.totalorder %s49, %s63
      %p65 = scmp.eq.s32.totalorder %s18, 0
      %p66 = por %p64, %p65
      %s68 = sadd.s32 %s67, 1
      %p71 = scmp.eq.s32.totalorder %s12, 1
      %p72 = scmp.ne.s32.totalorder %s67, %s69
      %p73 = scmp.eq.s32.totalorder %s12, 0
      %p74 = por %p72, %p73
      %p75 = scmp.ne.s32.totalorder %s67, %s69
      %p76 = scmp.eq.s32.totalorder %s17, 1
      %p77 = por %p75, %p76
      %p78 = scmp.ne.s32.totalorder %s69, %s70
      %p79 = scmp.eq.s32.totalorder %s17, 0
      %p80 = por %p78, %p79
      %p81 = scmp.ne.s32.totalorder %s69, %s70
      %p82 = scmp.eq.s32.totalorder %s18, 1
      %p83 = por %p81, %p82
      %p85 = scmp.ne.s32.totalorder %s70, %s84
      %p86 = scmp.eq.s32.totalorder %s18, 0
      %p87 = por %p85, %p86
      %s88 = ssub.s32 %s12, %s19
      %p89 = scmp.eq.s32.totalorder %s88, 0
      %s91 = sadd.s32 %s90, 1
      %s92 = scalar_select %p89, %s90, %s91
      %p95 = pneg %p89
      %p96 = scmp.eq.s32.totalorder %s12, 1
      %p97 = por %p95, %p96
      %p98 = scmp.ne.s32.totalorder %s90, %s93
      %p99 = scmp.eq.s32.totalorder %s12, 0
      %p100 = por %p98, %p99
      %p101 = scmp.ne.s32.totalorder %s90, %s93
      %p102 = scmp.eq.s32.totalorder %s17, 1
      %p103 = por %p101, %p102
      %p104 = scmp.ne.s32.totalorder %s93, %s94
      %p105 = scmp.eq.s32.totalorder %s17, 0
      %p106 = por %p104, %p105
      %p107 = scmp.ne.s32.totalorder %s93, %s94
      %p108 = scmp.eq.s32.totalorder %s18, 1
      %p109 = por %p107, %p108
      %p111 = scmp.ne.s32.totalorder %s94, %s110
      %p112 = scmp.eq.s32.totalorder %s18, 0
      %p113 = por %p111, %p112
      %p114 = scmp.le.s32.totalorder 1, %s12
      %p115 = scmp.lt.s32.totalorder %s12, 3
      %p116 = pnand %p114, %p115
      %p117 = pneg %p116
      // Predicated region
      $region9: #{tpu_custom_call.1} parent=5 // pred_check
        _
      $region10: #{tpu_custom_call.1} parent=5 // pred_check_branch
        %119 = sbr.rel (%p116) target = $region12
      $region11: #{tpu_custom_call.1} parent=5 // pred_region
        %s120 = ssub.s32 %s12, 1
        // Predicated region
        $region13: #{tpu_custom_call.1} parent=11 // pred_check
          %p121 = pneg %p59
        $region14: #{tpu_custom_call.1} parent=11 // pred_check_branch
          %123 = sbr.rel (%p121) target = $region16
        $region15: #{tpu_custom_call.1} parent=11 // pred_region
          _
        $region16: #{tpu_custom_call.1} parent=11 // pred_fallthru
          _
        // Predicated region
        $region17: #{tpu_custom_call.1} parent=11 // pred_check
          %p124 = pneg %p80
        $region18: #{tpu_custom_call.1} parent=11 // pred_check_branch
          %126 = sbr.rel (%p124) target = $region20
        $region19: #{tpu_custom_call.1} parent=11 // pred_region
          _
        $region20: #{tpu_custom_call.1} parent=11 // pred_fallthru
          _
      $region12: #{tpu_custom_call.1} parent=5 // pred_fallthru
        _
      %p127 = scmp.lt.s32.totalorder %s12, 2
      // Predicated region
      $region21: #{tpu_custom_call.1} parent=5 // pred_check
        %p128 = pneg %p127
      $region22: #{tpu_custom_call.1} parent=5 // pred_check_branch
        %130 = sbr.rel (%p128) target = $region24
      $region23: #{tpu_custom_call.1} parent=5 // pred_region
        // Predicated region
        $region25: #{tpu_custom_call.1} parent=23 // pred_check
          %p131 = pneg %p32
        $region26: #{tpu_custom_call.1} parent=23 // pred_check_branch
          %133 = sbr.rel (%p131) target = $region28
        $region27: #{tpu_custom_call.1} parent=23 // pred_region
          %p134 = scmp.lt.s32.totalorder %s12, 1
          %s135 = scalar_select %p134, %s12, 1
          %s136 = smul.addr %s135, 54
          %s137 = smul.addr %s136, 4
          %s138 = scalar_lea.vmem %s0, %s137
        $region28: #{tpu_custom_call.1} parent=23 // pred_fallthru
          _
      $region24: #{tpu_custom_call.1} parent=5 // pred_fallthru
        _
      %p139 = scmp.le.s32.totalorder 1, %s12
      %p140 = scmp.lt.s32.totalorder %s12, 3
      %p141 = pnand %p139, %p140
      %p142 = pneg %p141
      // Predicated region
      $region29: #{tpu_custom_call.1} parent=5 // pred_check
        _
      $region30: #{tpu_custom_call.1} parent=5 // pred_check_branch
        %144 = sbr.rel (%p141) target = $region32
      $region31: #{tpu_custom_call.1} parent=5 // pred_region
        %s145 = ssub.s32 %s12, 1
        %p146 = scmp.lt.s32.totalorder %s17, 1
        %s147 = scalar_select %p146, %s17, 1
        %s148 = smul.addr %s147, 54
        %s149 = smul.addr %s148, 4
        %s150 = scalar_lea.vmem %s0, %s149
        %p151 = pneg %p38
        %p152 = pneg %p35
        %p153 = pneg %p59
        %p154 = pneg %p56
        %p155 = pneg %p80
        %p156 = pneg %p77
        %p157 = pneg %p106
        %p158 = pneg %p103
        %s159 = sand.u32 %s93, 1
        %s160 = scalar_lea.sflag [#allocation3], %s159
        %s161 = sand.u32 %s93, 1
        %s162 = smul.addr %s161, 256
        %s163 = scalar_lea.vmem [#allocation2], %s162
        %p164 = scmp.lt.s32.totalorder %s17, 1
        %s165 = scalar_select %p164, %s17, 1
        %s166 = smul.addr %s165, 54
        %s167 = smul.addr %s166, 4
        %s168 = scalar_lea.vmem %s0, %s167
        %v170 = vld [vmem:[%s168] sm:$0xf]
        %v171 = vld [vmem:[%s168 + $0x4] sm:$0xf]
        %v172 = vld [vmem:[%s168 + $0x8] sm:$0x1]
        %v173 = vld [vmem:[%s168 + $0xc] sm:$0xf]
        %v174 = vld [vmem:[%s168 + $0x10] sm:$0xf]
        %v175 = vld [vmem:[%s168 + $0x14] sm:$0x1]
        %v176 = vld [vmem:[%s168 + $0x18] sm:$0xf]
        %v177 = vld [vmem:[%s168 + $0x1c] sm:$0xf]
        %v178 = vld [vmem:[%s168 + $0x20] sm:$0x1]
        %v179 = vld [vmem:[%s168 + $0x24] sm:$0xf]
        %v180 = vld [vmem:[%s168 + $0x28] sm:$0xf]
        %v181 = vld [vmem:[%s168 + $0x2c] sm:$0x1]
        %v182 = vld [vmem:[%s168 + $0x30] sm:$0xf]
        %v183 = vld [vmem:[%s168 + $0x34] sm:$0xf]
        %v184 = vld [vmem:[%s168 + $0x38] sm:$0x1]
        %v185 = vld [vmem:[%s168 + $0x3c] sm:$0xf]
        %v186 = vld [vmem:[%s168 + $0x40] sm:$0xf]
        %v187 = vld [vmem:[%s168 + $0x44] sm:$0x1]
        %v188 = vld [vmem:[%s168 + $0x48] sm:$0xf]
        %v189 = vld [vmem:[%s168 + $0x4c] sm:$0xf]
        %v190 = vld [vmem:[%s168 + $0x50] sm:$0x1]
        %v191 = vld [vmem:[%s168 + $0x54] sm:$0xf]
        %v192 = vld [vmem:[%s168 + $0x58] sm:$0xf]
        %v193 = vld [vmem:[%s168 + $0x5c] sm:$0x1]
        %v194 = vld [vmem:[%s168 + $0x60] sm:$0xf]
        %v195 = vld [vmem:[%s168 + $0x64] sm:$0xf]
        %v196 = vld [vmem:[%s168 + $0x68] sm:$0x1]
        %v197 = vld [vmem:[%s168 + $0x6c] sm:$0xf]
        %v198 = vld [vmem:[%s168 + $0x70] sm:$0xf]
        %v199 = vld [vmem:[%s168 + $0x74] sm:$0x1]
        %v200 = vld [vmem:[%s168 + $0x78] sm:$0xf]
        %v201 = vld [vmem:[%s168 + $0x7c] sm:$0xf]
        %v202 = vld [vmem:[%s168 + $0x80] sm:$0x1]
        %v203 = vld [vmem:[%s168 + $0x84] sm:$0xf]
        %v204 = vld [vmem:[%s168 + $0x88] sm:$0xf]
        %v205 = vld [vmem:[%s168 + $0x8c] sm:$0x1]
        %v206 = vld [vmem:[%s168 + $0x90] sm:$0xf]
        %v207 = vld [vmem:[%s168 + $0x94] sm:$0xf]
        %v208 = vld [vmem:[%s168 + $0x98] sm:$0x1]
        %v209 = vld [vmem:[%s168 + $0x9c] sm:$0xf]
        %v210 = vld [vmem:[%s168 + $0xa0] sm:$0xf]
        %v211 = vld [vmem:[%s168 + $0xa4] sm:$0x1]
        %v212 = vld [vmem:[%s168 + $0xa8] sm:$0xf]
        %v213 = vld [vmem:[%s168 + $0xac] sm:$0xf]
        %v214 = vld [vmem:[%s168 + $0xb0] sm:$0x1]
        %v215 = vld [vmem:[%s168 + $0xb4] sm:$0xf]
        %v216 = vld [vmem:[%s168 + $0xb8] sm:$0xf]
        %v217 = vld [vmem:[%s168 + $0xbc] sm:$0x1]
        %v218 = vld [vmem:[%s168 + $0xc0] sm:$0xf]
        %v219 = vld [vmem:[%s168 + $0xc4] sm:$0xf]
        %v220 = vld [vmem:[%s168 + $0xc8] sm:$0x1]
        %v221 = vld [vmem:[%s168 + $0xcc] sm:$0xf]
        %v222 = vld [vmem:[%s168 + $0xd0] sm:$0xf]
        %v223 = vld [vmem:[%s168 + $0xd4] sm:$0x1]
        %v224 = vld [vmem:[%s1] sm:$0xf]
        %vm225 = vsmask.f32 3328
        %vm226 = vsmask.f32 7440
        %vm227 = vmor %vm225, %vm226
        %v229 = vshrl.u32 %v170, 16
        %v231 = vrot.slane %v229, 4
        %v232 = vshll.u32 %v170, 16
        %v234 = vrot.slane %v232, 5
        %v235 = vor.u32 %v231, %v234
        %v236 = vrot.slane %v235, 4
        %v238 = vshll.u32 %v171, 16
        %v240 = vrot.slane %v238, 5
        %v241 = vsel %vm227, %v236, %v240
        %v242 = vshrl.u32 %v171, 16
        %v244 = vrot.slane %v242, 4
        %v245 = vor.u32 %v244, %v240
        %v246 = vrot.slane %v245, 4
        %v248 = vshll.u32 %v172, 16
        %v250 = vrot.slane %v248, 5
        %v251 = vsel %vm227, %v246, %v250
        %v253 = vshrl.u32 %v173, 16
        %v255 = vrot.slane %v253, 4
        %v256 = vshll.u32 %v173, 16
        %v258 = vrot.slane %v256, 5
        %v259 = vor.u32 %v255, %v258
        %v260 = vrot.slane %v259, 4
        %v262 = vshll.u32 %v174, 16
        %v264 = vrot.slane %v262, 5
        %v265 = vsel %vm227, %v260, %v264
        %v266 = vshrl.u32 %v174, 16
        %v268 = vrot.slane %v266, 4
        %v269 = vor.u32 %v268, %v264
        %v270 = vrot.slane %v269, 4
        %v272 = vshll.u32 %v175, 16
        %v274 = vrot.slane %v272, 5
        %v275 = vsel %vm227, %v270, %v274
        %v277 = vshrl.u32 %v176, 16
        %v279 = vrot.slane %v277, 4
        %v280 = vshll.u32 %v176, 16
        %v282 = vrot.slane %v280, 5
        %v283 = vor.u32 %v279, %v282
        %v284 = vrot.slane %v283, 4
        %v286 = vshll.u32 %v177, 16
        %v288 = vrot.slane %v286, 5
        %v289 = vsel %vm227, %v284, %v288
        %v290 = vshrl.u32 %v177, 16
        %v292 = vrot.slane %v290, 4
        %v293 = vor.u32 %v292, %v288
        %v294 = vrot.slane %v293, 4
        %v296 = vshll.u32 %v178, 16
        %v298 = vrot.slane %v296, 5
        %v299 = vsel %vm227, %v294, %v298
        %v301 = vshrl.u32 %v179, 16
        %v303 = vrot.slane %v301, 4
        %v304 = vshll.u32 %v179, 16
        %v306 = vrot.slane %v304, 5
        %v307 = vor.u32 %v303, %v306
        %v308 = vrot.slane %v307, 4
        %v310 = vshll.u32 %v180, 16
        %v312 = vrot.slane %v310, 5
        %v313 = vsel %vm227, %v308, %v312
        %v314 = vshrl.u32 %v180, 16
        %v316 = vrot.slane %v314, 4
        %v317 = vor.u32 %v316, %v312
        %v318 = vrot.slane %v317, 4
        %v320 = vshll.u32 %v181, 16
        %v322 = vrot.slane %v320, 5
        %v323 = vsel %vm227, %v318, %v322
        %v325 = vshrl.u32 %v182, 16
        %v327 = vrot.slane %v325, 4
        %v328 = vshll.u32 %v182, 16
        %v330 = vrot.slane %v328, 5
        %v331 = vor.u32 %v327, %v330
        %v332 = vrot.slane %v331, 4
        %v334 = vshll.u32 %v183, 16
        %v336 = vrot.slane %v334, 5
        %v337 = vsel %vm227, %v332, %v336
        %v338 = vshrl.u32 %v183, 16
        %v340 = vrot.slane %v338, 4
        %v341 = vor.u32 %v340, %v336
        %v342 = vrot.slane %v341, 4
        %v344 = vshll.u32 %v184, 16
        %v346 = vrot.slane %v344, 5
        %v347 = vsel %vm227, %v342, %v346
        %v349 = vshrl.u32 %v185, 16
        %v351 = vrot.slane %v349, 4
        %v352 = vshll.u32 %v185, 16
        %v354 = vrot.slane %v352, 5
        %v355 = vor.u32 %v351, %v354
        %v356 = vrot.slane %v355, 4
        %v358 = vshll.u32 %v186, 16
        %v360 = vrot.slane %v358, 5
        %v361 = vsel %vm227, %v356, %v360
        %v362 = vshrl.u32 %v186, 16
        %v364 = vrot.slane %v362, 4
        %v365 = vor.u32 %v364, %v360
        %v366 = vrot.slane %v365, 4
        %v368 = vshll.u32 %v187, 16
        %v370 = vrot.slane %v368, 5
        %v371 = vsel %vm227, %v366, %v370
        %v373 = vshrl.u32 %v188, 16
        %v375 = vrot.slane %v373, 4
        %v376 = vshll.u32 %v188, 16
        %v378 = vrot.slane %v376, 5
        %v379 = vor.u32 %v375, %v378
        %v380 = vrot.slane %v379, 4
        %v382 = vshll.u32 %v189, 16
        %v384 = vrot.slane %v382, 5
        %v385 = vsel %vm227, %v380, %v384
        %v386 = vshrl.u32 %v189, 16
        %v388 = vrot.slane %v386, 4
        %v389 = vor.u32 %v388, %v384
        %v390 = vrot.slane %v389, 4
        %v392 = vshll.u32 %v190, 16
        %v394 = vrot.slane %v392, 5
        %v395 = vsel %vm227, %v390, %v394
        %v397 = vshrl.u32 %v191, 16
        %v399 = vrot.slane %v397, 4
        %v400 = vshll.u32 %v191, 16
        %v402 = vrot.slane %v400, 5
        %v403 = vor.u32 %v399, %v402
        %v404 = vrot.slane %v403, 4
        %v406 = vshll.u32 %v192, 16
        %v408 = vrot.slane %v406, 5
        %v409 = vsel %vm227, %v404, %v408
        %v410 = vshrl.u32 %v192, 16
        %v412 = vrot.slane %v410, 4
        %v413 = vor.u32 %v412, %v408
        %v414 = vrot.slane %v413, 4
        %v416 = vshll.u32 %v193, 16
        %v418 = vrot.slane %v416, 5
        %v419 = vsel %vm227, %v414, %v418
        %v421 = vshrl.u32 %v194, 16
        %v423 = vrot.slane %v421, 4
        %v424 = vshll.u32 %v194, 16
        %v426 = vrot.slane %v424, 5
        %v427 = vor.u32 %v423, %v426
        %v428 = vrot.slane %v427, 4
        %v430 = vshll.u32 %v195, 16
        %v432 = vrot.slane %v430, 5
        %v433 = vsel %vm227, %v428, %v432
        %v434 = vshrl.u32 %v195, 16
        %v436 = vrot.slane %v434, 4
        %v437 = vor.u32 %v436, %v432
        %v438 = vrot.slane %v437, 4
        %v440 = vshll.u32 %v196, 16
        %v442 = vrot.slane %v440, 5
        %v443 = vsel %vm227, %v438, %v442
        %v445 = vshrl.u32 %v197, 16
        %v447 = vrot.slane %v445, 4
        %v448 = vshll.u32 %v197, 16
        %v450 = vrot.slane %v448, 5
        %v451 = vor.u32 %v447, %v450
        %v452 = vrot.slane %v451, 4
        %v454 = vshll.u32 %v198, 16
        %v456 = vrot.slane %v454, 5
        %v457 = vsel %vm227, %v452, %v456
        %v458 = vshrl.u32 %v198, 16
        %v460 = vrot.slane %v458, 4
        %v461 = vor.u32 %v460, %v456
        %v462 = vrot.slane %v461, 4
        %v464 = vshll.u32 %v199, 16
        %v466 = vrot.slane %v464, 5
        %v467 = vsel %vm227, %v462, %v466
        %v469 = vshrl.u32 %v200, 16
        %v471 = vrot.slane %v469, 4
        %v472 = vshll.u32 %v200, 16
        %v474 = vrot.slane %v472, 5
        %v475 = vor.u32 %v471, %v474
        %v476 = vrot.slane %v475, 4
        %v478 = vshll.u32 %v201, 16
        %v480 = vrot.slane %v478, 5
        %v481 = vsel %vm227, %v476, %v480
        %v482 = vshrl.u32 %v201, 16
        %v484 = vrot.slane %v482, 4
        %v485 = vor.u32 %v484, %v480
        %v486 = vrot.slane %v485, 4
        %v488 = vshll.u32 %v202, 16
        %v490 = vrot.slane %v488, 5
        %v491 = vsel %vm227, %v486, %v490
        %v493 = vshrl.u32 %v203, 16
        %v495 = vrot.slane %v493, 4
        %v496 = vshll.u32 %v203, 16
        %v498 = vrot.slane %v496, 5
        %v499 = vor.u32 %v495, %v498
        %v500 = vrot.slane %v499, 4
        %v502 = vshll.u32 %v204, 16
        %v504 = vrot.slane %v502, 5
        %v505 = vsel %vm227, %v500, %v504
        %v506 = vshrl.u32 %v204, 16
        %v508 = vrot.slane %v506, 4
        %v509 = vor.u32 %v508, %v504
        %v510 = vrot.slane %v509, 4
        %v512 = vshll.u32 %v205, 16
        %v514 = vrot.slane %v512, 5
        %v515 = vsel %vm227, %v510, %v514
        %v517 = vshrl.u32 %v206, 16
        %v519 = vrot.slane %v517, 4
        %v520 = vshll.u32 %v206, 16
        %v522 = vrot.slane %v520, 5
        %v523 = vor.u32 %v519, %v522
        %v524 = vrot.slane %v523, 4
        %v526 = vshll.u32 %v207, 16
        %v528 = vrot.slane %v526, 5
        %v529 = vsel %vm227, %v524, %v528
        %v530 = vshrl.u32 %v207, 16
        %v532 = vrot.slane %v530, 4
        %v533 = vor.u32 %v532, %v528
        %v534 = vrot.slane %v533, 4
        %v536 = vshll.u32 %v208, 16
        %v538 = vrot.slane %v536, 5
        %v539 = vsel %vm227, %v534, %v538
        %v541 = vshrl.u32 %v209, 16
        %v543 = vrot.slane %v541, 4
        %v544 = vshll.u32 %v209, 16
        %v546 = vrot.slane %v544, 5
        %v547 = vor.u32 %v543, %v546
        %v548 = vrot.slane %v547, 4
        %v550 = vshll.u32 %v210, 16
        %v552 = vrot.slane %v550, 5
        %v553 = vsel %vm227, %v548, %v552
        %v554 = vshrl.u32 %v210, 16
        %v556 = vrot.slane %v554, 4
        %v557 = vor.u32 %v556, %v552
        %v558 = vrot.slane %v557, 4
        %v560 = vshll.u32 %v211, 16
        %v562 = vrot.slane %v560, 5
        %v563 = vsel %vm227, %v558, %v562
        %v565 = vshrl.u32 %v212, 16
        %v567 = vrot.slane %v565, 4
        %v568 = vshll.u32 %v212, 16
        %v570 = vrot.slane %v568, 5
        %v571 = vor.u32 %v567, %v570
        %v572 = vrot.slane %v571, 4
        %v574 = vshll.u32 %v213, 16
        %v576 = vrot.slane %v574, 5
        %v577 = vsel %vm227, %v572, %v576
        %v578 = vshrl.u32 %v213, 16
        %v580 = vrot.slane %v578, 4
        %v581 = vor.u32 %v580, %v576
        %v582 = vrot.slane %v581, 4
        %v584 = vshll.u32 %v214, 16
        %v586 = vrot.slane %v584, 5
        %v587 = vsel %vm227, %v582, %v586
        %v589 = vshrl.u32 %v215, 16
        %v591 = vrot.slane %v589, 4
        %v592 = vshll.u32 %v215, 16
        %v594 = vrot.slane %v592, 5
        %v595 = vor.u32 %v591, %v594
        %v596 = vrot.slane %v595, 4
        %v598 = vshll.u32 %v216, 16
        %v600 = vrot.slane %v598, 5
        %v601 = vsel %vm227, %v596, %v600
        %v602 = vshrl.u32 %v216, 16
        %v604 = vrot.slane %v602, 4
        %v605 = vor.u32 %v604, %v600
        %v606 = vrot.slane %v605, 4
        %v608 = vshll.u32 %v217, 16
        %v610 = vrot.slane %v608, 5
        %v611 = vsel %vm227, %v606, %v610
        %s612 = scalar_lea.vmem %s1, 4
        %v613 = vld [vmem:[%s612] sm:$0xf]
        %v614 = vunpack.c.l.b16 %v241
        %v615 = vunpack.c.l.b16 %v251
        %v616 = vunpack.c.l.b16 %v265
        %v617 = vunpack.c.l.b16 %v275
        %v618 = vunpack.c.l.b16 %v289
        %v619 = vunpack.c.l.b16 %v299
        %v620 = vunpack.c.l.b16 %v313
        %v621 = vunpack.c.l.b16 %v323
        %v622 = vunpack.c.l.b16 %v337
        %v623 = vunpack.c.l.b16 %v347
        %v624 = vunpack.c.l.b16 %v361
        %v625 = vunpack.c.l.b16 %v371
        %v626 = vunpack.c.l.b16 %v385
        %v627 = vunpack.c.l.b16 %v395
        %v628 = vunpack.c.l.b16 %v409
        %v629 = vunpack.c.l.b16 %v419
        %v630 = vunpack.c.l.b16 %v433
        %v631 = vunpack.c.l.b16 %v443
        %v632 = vunpack.c.l.b16 %v457
        %v633 = vunpack.c.l.b16 %v467
        %v634 = vunpack.c.l.b16 %v481
        %v635 = vunpack.c.l.b16 %v491
        %v636 = vunpack.c.l.b16 %v505
        %v637 = vunpack.c.l.b16 %v515
        %v638 = vunpack.c.l.b16 %v529
        %v639 = vunpack.c.l.b16 %v539
        %v640 = vunpack.c.l.b16 %v553
        %v641 = vunpack.c.l.b16 %v563
        %v642 = vunpack.c.l.b16 %v577
        %v643 = vunpack.c.l.b16 %v587
        %v644 = vunpack.c.l.b16 %v601
        %v645 = vunpack.c.l.b16 %v611
        %v646 = vpack.c.b16 %v615, %v614
        %v647 = vpack.c.b16 %v617, %v616
        %v648 = vpack.c.b16 %v619, %v618
        %v649 = vpack.c.b16 %v621, %v620
        %v650 = vpack.c.b16 %v623, %v622
        %v651 = vpack.c.b16 %v625, %v624
        %v652 = vpack.c.b16 %v627, %v626
        %v653 = vpack.c.b16 %v629, %v628
        %v654 = vpack.c.b16 %v631, %v630
        %v655 = vpack.c.b16 %v633, %v632
        %v656 = vpack.c.b16 %v635, %v634
        %v657 = vpack.c.b16 %v637, %v636
        %v658 = vpack.c.b16 %v639, %v638
        %v659 = vpack.c.b16 %v641, %v640
        %v660 = vpack.c.b16 %v643, %v642
        %v661 = vpack.c.b16 %v645, %v644
        %vm662 = vcmask 64512
        %v664 = vsel %vm662, %v646, 0
        %v667 = vsel %vm662, %v647, 0
        %v670 = vsel %vm662, %v648, 0
        %v673 = vsel %vm662, %v649, 0
        %v676 = vsel %vm662, %v650, 0
        %v679 = vsel %vm662, %v651, 0
        %v682 = vsel %vm662, %v652, 0
        %v685 = vsel %vm662, %v653, 0
        %v688 = vsel %vm662, %v654, 0
        %v691 = vsel %vm662, %v655, 0
        %v694 = vsel %vm662, %v656, 0
        %v697 = vsel %vm662, %v657, 0
        %v700 = vsel %vm662, %v658, 0
        %v703 = vsel %vm662, %v659, 0
        %v706 = vsel %vm662, %v660, 0
        %v709 = vsel %vm662, %v661, 0
        %vm711 = vcmask 1043456
        %v713 = vsel %vm711, %v613, 0
        %715 = vmatprep.subr.bf16.mxu0 0
        %716 = vmatpush1.bf16.msra.mxu0 %v713
        %717 = vmatprep.subr.bf16.mxu0 0
        %718 = vmatpush1.bf16.msra.mxu0 0
        %719 = vmatprep.subr.bf16.mxu0 0
        %720 = vmatpush1.bf16.msra.mxu0 0
        %721 = vmatprep.subr.bf16.mxu0 0
        %722 = vmatpush1.bf16.msra.mxu0 0
        %723 = vmatprep.subr.bf16.mxu0 0
        %724 = vmatpush1.bf16.msra.mxu0 0
        %725 = vmatprep.subr.bf16.mxu0 0
        %726 = vmatpush1.bf16.msra.mxu0 0
        %727 = vmatprep.subr.bf16.mxu0 0
        %728 = vmatpush1.bf16.msra.mxu0 0
        %729 = vmatprep.subr.bf16.mxu0 0
        %730 = vmatpush1.bf16.msra.mxu0 0
        %731 = vmatprep.subr.bf16.mxu0 0
        %732 = vmatpush1.bf16.msra.mxu0 0
        %733 = vmatprep.subr.bf16.mxu0 0
        %734 = vmatpush1.bf16.msra.mxu0 0
        %735 = vmatprep.subr.bf16.mxu0 0
        %736 = vmatpush1.bf16.msra.mxu0 0
        %737 = vmatprep.subr.bf16.mxu0 0
        %738 = vmatpush1.bf16.msra.mxu0 0
        %739 = vmatprep.subr.bf16.mxu0 0
        %740 = vmatpush1.bf16.msra.mxu0 0
        %741 = vmatprep.subr.bf16.mxu0 0
        %742 = vmatpush1.bf16.msra.mxu0 0
        %743 = vmatprep.subr.bf16.mxu0 0
        %744 = vmatpush1.bf16.msra.mxu0 0
        %745 = vmatprep.subr.bf16.mxu0 0
        %746 = vmatpush1.bf16.msra.mxu0 0
        %747 = vmatprep.mubr.bf16.mxu0 0
        %748 = vmatmul.mubr.bf16.gmra.mrb[0].mxu0 %v664
        %v749 = vpop.f32.mrb[0].mxu0
        %v750 = vadd.f32 0.0, %v749
        %v751 = vpop.f32.mrb[0].mxu0
        %v752 = vpop.f32.mrb[0].mxu0
        %v753 = vadd.f32 0.0, %v752
        %v754 = vpop.f32.mrb[0].mxu0
        %755 = vmatprep.mubr.bf16.mxu0 0
        %756 = vmatmul.mubr.bf16.gmra.mrb[0].mxu0 %v667
        %v757 = vpop.f32.mrb[0].mxu0
        %v758 = vadd.f32 0.0, %v757
        %v759 = vpop.f32.mrb[0].mxu0
        %v760 = vpop.f32.mrb[0].mxu0
        %v761 = vadd.f32 0.0, %v760
        %v762 = vpop.f32.mrb[0].mxu0
        %763 = vmatprep.mubr.bf16.mxu0 0
        %764 = vmatmul.mubr.bf16.gmra.mrb[0].mxu0 %v670
        %v765 = vpop.f32.mrb[0].mxu0
        %v766 = vadd.f32 0.0, %v765
        %v767 = vpop.f32.mrb[0].mxu0
        %v768 = vpop.f32.mrb[0].mxu0
        %v769 = vadd.f32 0.0, %v768
        %v770 = vpop.f32.mrb[0].mxu0
        %771 = vmatprep.mubr.bf16.mxu0 0
        %772 = vmatmul.mubr.bf16.gmra.mrb[0].mxu0 %v673
        %v773 = vpop.f32.mrb[0].mxu0
        %v774 = vadd.f32 0.0, %v773
        %v775 = vpop.f32.mrb[0].mxu0
        %v776 = vpop.f32.mrb[0].mxu0
        %v777 = vadd.f32 0.0, %v776
        %v778 = vpop.f32.mrb[0].mxu0
        %779 = vmatprep.mubr.bf16.mxu0 0
        %780 = vmatmul.mubr.bf16.gmra.mrb[0].mxu0 %v676
        %v781 = vpop.f32.mrb[0].mxu0
        %v782 = vadd.f32 0.0, %v781
        %v783 = vpop.f32.mrb[0].mxu0
        %v784 = vpop.f32.mrb[0].mxu0
        %v785 = vadd.f32 0.0, %v784
        %v786 = vpop.f32.mrb[0].mxu0
        %787 = vmatprep.mubr.bf16.mxu0 0
        %788 = vmatmul.mubr.bf16.gmra.mrb[0].mxu0 %v679
        %v789 = vpop.f32.mrb[0].mxu0
        %v790 = vadd.f32 0.0, %v789
        %v791 = vpop.f32.mrb[0].mxu0
        %v792 = vpop.f32.mrb[0].mxu0
        %v793 = vadd.f32 0.0, %v792
        %v794 = vpop.f32.mrb[0].mxu0
        %795 = vmatprep.mubr.bf16.mxu0 0
        %796 = vmatmul.mubr.bf16.gmra.mrb[0].mxu0 %v682
        %v797 = vpop.f32.mrb[0].mxu0
        %v798 = vadd.f32 0.0, %v797
        %v799 = vpop.f32.mrb[0].mxu0
        %v800 = vpop.f32.mrb[0].mxu0
        %v801 = vadd.f32 0.0, %v800
        %v802 = vpop.f32.mrb[0].mxu0
        %803 = vmatprep.mubr.bf16.mxu0 0
        %804 = vmatmul.mubr.bf16.gmra.mrb[0].mxu0 %v685
        %v805 = vpop.f32.mrb[0].mxu0
        %v806 = vadd.f32 0.0, %v805
        %v807 = vpop.f32.mrb[0].mxu0
        %v808 = vpop.f32.mrb[0].mxu0
        %v809 = vadd.f32 0.0, %v808
        %v810 = vpop.f32.mrb[0].mxu0
        %811 = vmatprep.mubr.bf16.mxu0 0
        %812 = vmatmul.mubr.bf16.gmra.mrb[0].mxu0 %v688
        %v813 = vpop.f32.mrb[0].mxu0
        %v814 = vadd.f32 0.0, %v813
        %v815 = vpop.f32.mrb[0].mxu0
        %v816 = vpop.f32.mrb[0].mxu0
        %v817 = vadd.f32 0.0, %v816
        %v818 = vpop.f32.mrb[0].mxu0
        %819 = vmatprep.mubr.bf16.mxu0 0
        %820 = vmatmul.mubr.bf16.gmra.mrb[0].mxu0 %v691
        %v821 = vpop.f32.mrb[0].mxu0
        %v822 = vadd.f32 0.0, %v821
        %v823 = vpop.f32.mrb[0].mxu0
        %v824 = vpop.f32.mrb[0].mxu0
        %v825 = vadd.f32 0.0, %v824
        %v826 = vpop.f32.mrb[0].mxu0
        %827 = vmatprep.mubr.bf16.mxu0 0
        %828 = vmatmul.mubr.bf16.gmra.mrb[0].mxu0 %v694
        %v829 = vpop.f32.mrb[0].mxu0
        %v830 = vadd.f32 0.0, %v829
        %v831 = vpop.f32.mrb[0].mxu0
        %v832 = vpop.f32.mrb[0].mxu0
        %v833 = vadd.f32 0.0, %v832
        %v834 = vpop.f32.mrb[0].mxu0
        %835 = vmatprep.mubr.bf16.mxu0 0
        %836 = vmatmul.mubr.bf16.gmra.mrb[0].mxu0 %v697
        %v837 = vpop.f32.mrb[0].mxu0
        %v838 = vadd.f32 0.0, %v837
        %v839 = vpop.f32.mrb[0].mxu0
        %v840 = vpop.f32.mrb[0].mxu0
        %v841 = vadd.f32 0.0, %v840
        %v842 = vpop.f32.mrb[0].mxu0
        %843 = vmatprep.mubr.bf16.mxu0 0
        %844 = vmatmul.mubr.bf16.gmra.mrb[0].mxu0 %v700
        %v845 = vpop.f32.mrb[0].mxu0
        %v846 = vadd.f32 0.0, %v845
        %v847 = vpop.f32.mrb[0].mxu0
        %v848 = vpop.f32.mrb[0].mxu0
        %v849 = vadd.f32 0.0, %v848
        %v850 = vpop.f32.mrb[0].mxu0
        %851 = vmatprep.mubr.bf16.mxu0 0
        %852 = vmatmul.mubr.bf16.gmra.mrb[0].mxu0 %v703
        %v853 = vpop.f32.mrb[0].mxu0
        %v854 = vadd.f32 0.0, %v853
        %v855 = vpop.f32.mrb[0].mxu0
        %v856 = vpop.f32.mrb[0].mxu0
        %v857 = vadd.f32 0.0, %v856
        %v858 = vpop.f32.mrb[0].mxu0
        %859 = vmatprep.mubr.bf16.mxu0 0
        %860 = vmatmul.mubr.bf16.gmra.mrb[0].mxu0 %v706
        %v861 = vpop.f32.mrb[0].mxu0
        %v862 = vadd.f32 0.0, %v861
        %v863 = vpop.f32.mrb[0].mxu0
        %v864 = vpop.f32.mrb[0].mxu0
        %v865 = vadd.f32 0.0, %v864
        %v866 = vpop.f32.mrb[0].mxu0
        %867 = vmatprep.mubr.bf16.mxu0 0
        %868 = vmatmul.mubr.bf16.gmra.mrb[0].mxu0 %v709
        %v869 = vpop.f32.mrb[0].mxu0
        %v870 = vadd.f32 0.0, %v869
        %v871 = vpop.f32.mrb[0].mxu0
        %v872 = vpop.f32.mrb[0].mxu0
        %v873 = vadd.f32 0.0, %v872
        %v874 = vpop.f32.mrb[0].mxu0
        %875 = vdwg.mxu0
        %v908 = vunpack.c.l.b16 %v170
        %v909 = vunpack.c.l.b16 %v171
        %v910 = vunpack.c.l.b16 %v173
        %v911 = vunpack.c.l.b16 %v174
        %v912 = vunpack.c.l.b16 %v176
        %v913 = vunpack.c.l.b16 %v177
        %v914 = vunpack.c.l.b16 %v179
        %v915 = vunpack.c.l.b16 %v180
        %v916 = vunpack.c.l.b16 %v182
        %v917 = vunpack.c.l.b16 %v183
        %v918 = vunpack.c.l.b16 %v185
        %v919 = vunpack.c.l.b16 %v186
        %v920 = vunpack.c.l.b16 %v188
        %v921 = vunpack.c.l.b16 %v189
        %v922 = vunpack.c.l.b16 %v191
        %v923 = vunpack.c.l.b16 %v192
        %v924 = vunpack.c.l.b16 %v194
        %v925 = vunpack.c.l.b16 %v195
        %v926 = vunpack.c.l.b16 %v197
        %v927 = vunpack.c.l.b16 %v198
        %v928 = vunpack.c.l.b16 %v200
        %v929 = vunpack.c.l.b16 %v201
        %v930 = vunpack.c.l.b16 %v203
        %v931 = vunpack.c.l.b16 %v204
        %v932 = vunpack.c.l.b16 %v206
        %v933 = vunpack.c.l.b16 %v207
        %v934 = vunpack.c.l.b16 %v209
        %v935 = vunpack.c.l.b16 %v210
        %v936 = vunpack.c.l.b16 %v212
        %v937 = vunpack.c.l.b16 %v213
        %v938 = vunpack.c.l.b16 %v215
        %v939 = vunpack.c.l.b16 %v216
        %v940 = vpack.c.b16 %v909, %v908
        %v941 = vpack.c.b16 %v911, %v910
        %v942 = vpack.c.b16 %v913, %v912
        %v943 = vpack.c.b16 %v915, %v914
        %v944 = vpack.c.b16 %v917, %v916
        %v945 = vpack.c.b16 %v919, %v918
        %v946 = vpack.c.b16 %v921, %v920
        %v947 = vpack.c.b16 %v923, %v922
        %v948 = vpack.c.b16 %v925, %v924
        %v949 = vpack.c.b16 %v927, %v926
        %v950 = vpack.c.b16 %v929, %v928
        %v951 = vpack.c.b16 %v931, %v930
        %v952 = vpack.c.b16 %v933, %v932
        %v953 = vpack.c.b16 %v935, %v934
        %v954 = vpack.c.b16 %v937, %v936
        %v955 = vpack.c.b16 %v939, %v938
        %v957 = vsel %vm662, %v940, 0
        %v960 = vsel %vm662, %v941, 0
        %v963 = vsel %vm662, %v942, 0
        %v966 = vsel %vm662, %v943, 0
        %v969 = vsel %vm662, %v944, 0
        %v972 = vsel %vm662, %v945, 0
        %v975 = vsel %vm662, %v946, 0
        %v978 = vsel %vm662, %v947, 0
        %v981 = vsel %vm662, %v948, 0
        %v984 = vsel %vm662, %v949, 0
        %v987 = vsel %vm662, %v950, 0
        %v990 = vsel %vm662, %v951, 0
        %v993 = vsel %vm662, %v952, 0
        %v996 = vsel %vm662, %v953, 0
        %v999 = vsel %vm662, %v954, 0
        %v1002 = vsel %vm662, %v955, 0
        %v1005 = vsel %vm711, %v224, 0
        %1007 = vmatprep.subr.bf16.mxu0 0
        %1008 = vmatpush1.bf16.msra.mxu0 %v1005
        %1009 = vmatprep.subr.bf16.mxu0 0
        %1010 = vmatpush1.bf16.msra.mxu0 0
        %1011 = vmatprep.subr.bf16.mxu0 0
        %1012 = vmatpush1.bf16.msra.mxu0 0
        %1013 = vmatprep.subr.bf16.mxu0 0
        %1014 = vmatpush1.bf16.msra.mxu0 0
        %1015 = vmatprep.subr.bf16.mxu0 0
        %1016 = vmatpush1.bf16.msra.mxu0 0
        %1017 = vmatprep.subr.bf16.mxu0 0
        %1018 = vmatpush1.bf16.msra.mxu0 0
        %1019 = vmatprep.subr.bf16.mxu0 0
        %1020 = vmatpush1.bf16.msra.mxu0 0
        %1021 = vmatprep.subr.bf16.mxu0 0
        %1022 = vmatpush1.bf16.msra.mxu0 0
        %1023 = vmatprep.subr.bf16.mxu0 0
        %1024 = vmatpush1.bf16.msra.mxu0 0
        %1025 = vmatprep.subr.bf16.mxu0 0
        %1026 = vmatpush1.bf16.msra.mxu0 0
        %1027 = vmatprep.subr.bf16.mxu0 0
        %1028 = vmatpush1.bf16.msra.mxu0 0
        %1029 = vmatprep.subr.bf16.mxu0 0
        %1030 = vmatpush1.bf16.msra.mxu0 0
        %1031 = vmatprep.subr.bf16.mxu0 0
        %1032 = vmatpush1.bf16.msra.mxu0 0
        %1033 = vmatprep.subr.bf16.mxu0 0
        %1034 = vmatpush1.bf16.msra.mxu0 0
        %1035 = vmatprep.subr.bf16.mxu0 0
        %1036 = vmatpush1.bf16.msra.mxu0 0
        %1037 = vmatprep.subr.bf16.mxu0 0
        %1038 = vmatpush1.bf16.msra.mxu0 0
        %1039 = vmatprep.mubr.bf16.mxu0 0
        %1040 = vmatmul.mubr.bf16.gmra.mrb[0].mxu0 %v957
        %v1041 = vpop.f32.mrb[0].mxu0
        %v1042 = vadd.f32 %v750, %v1041
        %v1043 = vpop.f32.mrb[0].mxu0
        %v1044 = vpop.f32.mrb[0].mxu0
        %v1045 = vadd.f32 %v753, %v1044
        %v1046 = vpop.f32.mrb[0].mxu0
        %1047 = vmatprep.mubr.bf16.mxu0 0
        %1048 = vmatmul.mubr.bf16.gmra.mrb[0].mxu0 %v960
        %v1049 = vpop.f32.mrb[0].mxu0
        %v1050 = vadd.f32 %v758, %v1049
        %v1051 = vpop.f32.mrb[0].mxu0
        %v1052 = vpop.f32.mrb[0].mxu0
        %v1053 = vadd.f32 %v761, %v1052
        %v1054 = vpop.f32.mrb[0].mxu0
        %1055 = vmatprep.mubr.bf16.mxu0 0
        %1056 = vmatmul.mubr.bf16.gmra.mrb[0].mxu0 %v963
        %v1057 = vpop.f32.mrb[0].mxu0
        %v1058 = vadd.f32 %v766, %v1057
        %v1059 = vpop.f32.mrb[0].mxu0
        %v1060 = vpop.f32.mrb[0].mxu0
        %v1061 = vadd.f32 %v769, %v1060
        %v1062 = vpop.f32.mrb[0].mxu0
        %1063 = vmatprep.mubr.bf16.mxu0 0
        %1064 = vmatmul.mubr.bf16.gmra.mrb[0].mxu0 %v966
        %v1065 = vpop.f32.mrb[0].mxu0
        %v1066 = vadd.f32 %v774, %v1065
        %v1067 = vpop.f32.mrb[0].mxu0
        %v1068 = vpop.f32.mrb[0].mxu0
        %v1069 = vadd.f32 %v777, %v1068
        %v1070 = vpop.f32.mrb[0].mxu0
        %1071 = vmatprep.mubr.bf16.mxu0 0
        %1072 = vmatmul.mubr.bf16.gmra.mrb[0].mxu0 %v969
        %v1073 = vpop.f32.mrb[0].mxu0
        %v1074 = vadd.f32 %v782, %v1073
        %v1075 = vpop.f32.mrb[0].mxu0
        %v1076 = vpop.f32.mrb[0].mxu0
        %v1077 = vadd.f32 %v785, %v1076
        %v1078 = vpop.f32.mrb[0].mxu0
        %1079 = vmatprep.mubr.bf16.mxu0 0
        %1080 = vmatmul.mubr.bf16.gmra.mrb[0].mxu0 %v972
        %v1081 = vpop.f32.mrb[0].mxu0
        %v1082 = vadd.f32 %v790, %v1081
        %v1083 = vpop.f32.mrb[0].mxu0
        %v1084 = vpop.f32.mrb[0].mxu0
        %v1085 = vadd.f32 %v793, %v1084
        %v1086 = vpop.f32.mrb[0].mxu0
        %1087 = vmatprep.mubr.bf16.mxu0 0
        %1088 = vmatmul.mubr.bf16.gmra.mrb[0].mxu0 %v975
        %v1089 = vpop.f32.mrb[0].mxu0
        %v1090 = vadd.f32 %v798, %v1089
        %v1091 = vpop.f32.mrb[0].mxu0
        %v1092 = vpop.f32.mrb[0].mxu0
        %v1093 = vadd.f32 %v801, %v1092
        %v1094 = vpop.f32.mrb[0].mxu0
        %1095 = vmatprep.mubr.bf16.mxu0 0
        %1096 = vmatmul.mubr.bf16.gmra.mrb[0].mxu0 %v978
        %v1097 = vpop.f32.mrb[0].mxu0
        %v1098 = vadd.f32 %v806, %v1097
        %v1099 = vpop.f32.mrb[0].mxu0
        %v1100 = vpop.f32.mrb[0].mxu0
        %v1101 = vadd.f32 %v809, %v1100
        %v1102 = vpop.f32.mrb[0].mxu0
        %1103 = vmatprep.mubr.bf16.mxu0 0
        %1104 = vmatmul.mubr.bf16.gmra.mrb[0].mxu0 %v981
        %v1105 = vpop.f32.mrb[0].mxu0
        %v1106 = vadd.f32 %v814, %v1105
        %v1107 = vpop.f32.mrb[0].mxu0
        %v1108 = vpop.f32.mrb[0].mxu0
        %v1109 = vadd.f32 %v817, %v1108
        %v1110 = vpop.f32.mrb[0].mxu0
        %1111 = vmatprep.mubr.bf16.mxu0 0
        %1112 = vmatmul.mubr.bf16.gmra.mrb[0].mxu0 %v984
        %v1113 = vpop.f32.mrb[0].mxu0
        %v1114 = vadd.f32 %v822, %v1113
        %v1115 = vpop.f32.mrb[0].mxu0
        %v1116 = vpop.f32.mrb[0].mxu0
        %v1117 = vadd.f32 %v825, %v1116
        %v1118 = vpop.f32.mrb[0].mxu0
        %1119 = vmatprep.mubr.bf16.mxu0 0
        %1120 = vmatmul.mubr.bf16.gmra.mrb[0].mxu0 %v987
        %v1121 = vpop.f32.mrb[0].mxu0
        %v1122 = vadd.f32 %v830, %v1121
        %v1123 = vpop.f32.mrb[0].mxu0
        %v1124 = vpop.f32.mrb[0].mxu0
        %v1125 = vadd.f32 %v833, %v1124
        %v1126 = vpop.f32.mrb[0].mxu0
        %1127 = vmatprep.mubr.bf16.mxu0 0
        %1128 = vmatmul.mubr.bf16.gmra.mrb[0].mxu0 %v990
        %v1129 = vpop.f32.mrb[0].mxu0
        %v1130 = vadd.f32 %v838, %v1129
        %v1131 = vpop.f32.mrb[0].mxu0
        %v1132 = vpop.f32.mrb[0].mxu0
        %v1133 = vadd.f32 %v841, %v1132
        %v1134 = vpop.f32.mrb[0].mxu0
        %1135 = vmatprep.mubr.bf16.mxu0 0
        %1136 = vmatmul.mubr.bf16.gmra.mrb[0].mxu0 %v993
        %v1137 = vpop.f32.mrb[0].mxu0
        %v1138 = vadd.f32 %v846, %v1137
        %v1139 = vpop.f32.mrb[0].mxu0
        %v1140 = vpop.f32.mrb[0].mxu0
        %v1141 = vadd.f32 %v849, %v1140
        %v1142 = vpop.f32.mrb[0].mxu0
        %1143 = vmatprep.mubr.bf16.mxu0 0
        %1144 = vmatmul.mubr.bf16.gmra.mrb[0].mxu0 %v996
        %v1145 = vpop.f32.mrb[0].mxu0
        %v1146 = vadd.f32 %v854, %v1145
        %v1147 = vpop.f32.mrb[0].mxu0
        %v1148 = vpop.f32.mrb[0].mxu0
        %v1149 = vadd.f32 %v857, %v1148
        %v1150 = vpop.f32.mrb[0].mxu0
        %1151 = vmatprep.mubr.bf16.mxu0 0
        %1152 = vmatmul.mubr.bf16.gmra.mrb[0].mxu0 %v999
        %v1153 = vpop.f32.mrb[0].mxu0
        %v1154 = vadd.f32 %v862, %v1153
        %v1155 = vpop.f32.mrb[0].mxu0
        %v1156 = vpop.f32.mrb[0].mxu0
        %v1157 = vadd.f32 %v865, %v1156
        %v1158 = vpop.f32.mrb[0].mxu0
        %1159 = vmatprep.mubr.bf16.mxu0 0
        %1160 = vmatmul.mubr.bf16.gmra.mrb[0].mxu0 %v1002
        %v1161 = vpop.f32.mrb[0].mxu0
        %v1162 = vadd.f32 %v870, %v1161
        %v1163 = vpop.f32.mrb[0].mxu0
        %v1164 = vpop.f32.mrb[0].mxu0
        %v1165 = vadd.f32 %v873, %v1164
        %v1166 = vpop.f32.mrb[0].mxu0
        %1167 = vdwg.mxu0
        %vm1184 = vcmask 1042432
        %vm1185 = vcmask 1046532
        %vm1186 = vmor %vm1184, %vm1185
        %v1187 = vrot.slane %v170, 5
        %v1188 = vrot.slane %v1187, 4
        %v1189 = vrot.slane %v171, 5
        %v1190 = vsel %vm1186, %v1188, %v1189
        %v1191 = vrot.slane %v1189, 4
        %v1192 = vrot.slane %v172, 5
        %v1193 = vsel %vm1186, %v1191, %v1192
        %v1194 = vrot.slane %v173, 5
        %v1195 = vrot.slane %v1194, 4
        %v1196 = vrot.slane %v174, 5
        %v1197 = vsel %vm1186, %v1195, %v1196
        %v1198 = vrot.slane %v1196, 4
        %v1199 = vrot.slane %v175, 5
        %v1200 = vsel %vm1186, %v1198, %v1199
        %v1201 = vrot.slane %v176, 5
        %v1202 = vrot.slane %v1201, 4
        %v1203 = vrot.slane %v177, 5
        %v1204 = vsel %vm1186, %v1202, %v1203
        %v1205 = vrot.slane %v1203, 4
        %v1206 = vrot.slane %v178, 5
        %v1207 = vsel %vm1186, %v1205, %v1206
        %v1208 = vrot.slane %v179, 5
        %v1209 = vrot.slane %v1208, 4
        %v1210 = vrot.slane %v180, 5
        %v1211 = vsel %vm1186, %v1209, %v1210
        %v1212 = vrot.slane %v1210, 4
        %v1213 = vrot.slane %v181, 5
        %v1214 = vsel %vm1186, %v1212, %v1213
        %v1215 = vrot.slane %v182, 5
        %v1216 = vrot.slane %v1215, 4
        %v1217 = vrot.slane %v183, 5
        %v1218 = vsel %vm1186, %v1216, %v1217
        %v1219 = vrot.slane %v1217, 4
        %v1220 = vrot.slane %v184, 5
        %v1221 = vsel %vm1186, %v1219, %v1220
        %v1222 = vrot.slane %v185, 5
        %v1223 = vrot.slane %v1222, 4
        %v1224 = vrot.slane %v186, 5
        %v1225 = vsel %vm1186, %v1223, %v1224
        %v1226 = vrot.slane %v1224, 4
        %v1227 = vrot.slane %v187, 5
        %v1228 = vsel %vm1186, %v1226, %v1227
        %v1229 = vrot.slane %v188, 5
        %v1230 = vrot.slane %v1229, 4
        %v1231 = vrot.slane %v189, 5
        %v1232 = vsel %vm1186, %v1230, %v1231
        %v1233 = vrot.slane %v1231, 4
        %v1234 = vrot.slane %v190, 5
        %v1235 = vsel %vm1186, %v1233, %v1234
        %v1236 = vrot.slane %v191, 5
        %v1237 = vrot.slane %v1236, 4
        %v1238 = vrot.slane %v192, 5
        %v1239 = vsel %vm1186, %v1237, %v1238
        %v1240 = vrot.slane %v1238, 4
        %v1241 = vrot.slane %v193, 5
        %v1242 = vsel %vm1186, %v1240, %v1241
        %v1243 = vrot.slane %v194, 5
        %v1244 = vrot.slane %v1243, 4
        %v1245 = vrot.slane %v195, 5
        %v1246 = vsel %vm1186, %v1244, %v1245
        %v1247 = vrot.slane %v1245, 4
        %v1248 = vrot.slane %v196, 5
        %v1249 = vsel %vm1186, %v1247, %v1248
        %v1250 = vrot.slane %v197, 5
        %v1251 = vrot.slane %v1250, 4
        %v1252 = vrot.slane %v198, 5
        %v1253 = vsel %vm1186, %v1251, %v1252
        %v1254 = vrot.slane %v1252, 4
        %v1255 = vrot.slane %v199, 5
        %v1256 = vsel %vm1186, %v1254, %v1255
        %v1257 = vrot.slane %v200, 5
        %v1258 = vrot.slane %v1257, 4
        %v1259 = vrot.slane %v201, 5
        %v1260 = vsel %vm1186, %v1258, %v1259
        %v1261 = vrot.slane %v1259, 4
        %v1262 = vrot.slane %v202, 5
        %v1263 = vsel %vm1186, %v1261, %v1262
        %v1264 = vrot.slane %v203, 5
        %v1265 = vrot.slane %v1264, 4
        %v1266 = vrot.slane %v204, 5
        %v1267 = vsel %vm1186, %v1265, %v1266
        %v1268 = vrot.slane %v1266, 4
        %v1269 = vrot.slane %v205, 5
        %v1270 = vsel %vm1186, %v1268, %v1269
        %v1271 = vrot.slane %v206, 5
        %v1272 = vrot.slane %v1271, 4
        %v1273 = vrot.slane %v207, 5
        %v1274 = vsel %vm1186, %v1272, %v1273
        %v1275 = vrot.slane %v1273, 4
        %v1276 = vrot.slane %v208, 5
        %v1277 = vsel %vm1186, %v1275, %v1276
        %v1278 = vrot.slane %v209, 5
        %v1279 = vrot.slane %v1278, 4
        %v1280 = vrot.slane %v210, 5
        %v1281 = vsel %vm1186, %v1279, %v1280
        %v1282 = vrot.slane %v1280, 4
        %v1283 = vrot.slane %v211, 5
        %v1284 = vsel %vm1186, %v1282, %v1283
        %v1285 = vrot.slane %v212, 5
        %v1286 = vrot.slane %v1285, 4
        %v1287 = vrot.slane %v213, 5
        %v1288 = vsel %vm1186, %v1286, %v1287
        %v1289 = vrot.slane %v1287, 4
        %v1290 = vrot.slane %v214, 5
        %v1291 = vsel %vm1186, %v1289, %v1290
        %v1292 = vrot.slane %v215, 5
        %v1293 = vrot.slane %v1292, 4
        %v1294 = vrot.slane %v216, 5
        %v1295 = vsel %vm1186, %v1293, %v1294
        %v1296 = vrot.slane %v1294, 4
        %v1297 = vrot.slane %v217, 5
        %v1298 = vsel %vm1186, %v1296, %v1297
        %s1299 = scalar_lea.vmem %s1, 8
        %v1300 = vld [vmem:[%s1299] sm:$0xf]
        %v1301 = vunpack.c.l.b16 %v1190
        %v1302 = vunpack.c.l.b16 %v1193
        %v1303 = vunpack.c.l.b16 %v1197
        %v1304 = vunpack.c.l.b16 %v1200
        %v1305 = vunpack.c.l.b16 %v1204
        %v1306 = vunpack.c.l.b16 %v1207
        %v1307 = vunpack.c.l.b16 %v1211
        %v1308 = vunpack.c.l.b16 %v1214
        %v1309 = vunpack.c.l.b16 %v1218
        %v1310 = vunpack.c.l.b16 %v1221
        %v1311 = vunpack.c.l.b16 %v1225
        %v1312 = vunpack.c.l.b16 %v1228
        %v1313 = vunpack.c.l.b16 %v1232
        %v1314 = vunpack.c.l.b16 %v1235
        %v1315 = vunpack.c.l.b16 %v1239
        %v1316 = vunpack.c.l.b16 %v1242
        %v1317 = vunpack.c.l.b16 %v1246
        %v1318 = vunpack.c.l.b16 %v1249
        %v1319 = vunpack.c.l.b16 %v1253
        %v1320 = vunpack.c.l.b16 %v1256
        %v1321 = vunpack.c.l.b16 %v1260
        %v1322 = vunpack.c.l.b16 %v1263
        %v1323 = vunpack.c.l.b16 %v1267
        %v1324 = vunpack.c.l.b16 %v1270
        %v1325 = vunpack.c.l.b16 %v1274
        %v1326 = vunpack.c.l.b16 %v1277
        %v1327 = vunpack.c.l.b16 %v1281
        %v1328 = vunpack.c.l.b16 %v1284
        %v1329 = vunpack.c.l.b16 %v1288
        %v1330 = vunpack.c.l.b16 %v1291
        %v1331 = vunpack.c.l.b16 %v1295
        %v1332 = vunpack.c.l.b16 %v1298
        %v1333 = vpack.c.b16 %v1302, %v1301
        %v1334 = vpack.c.b16 %v1304, %v1303
        %v1335 = vpack.c.b16 %v1306, %v1305
        %v1336 = vpack.c.b16 %v1308, %v1307
        %v1337 = vpack.c.b16 %v1310, %v1309
        %v1338 = vpack.c.b16 %v1312, %v1311
        %v1339 = vpack.c.b16 %v1314, %v1313
        %v1340 = vpack.c.b16 %v1316, %v1315
        %v1341 = vpack.c.b16 %v1318, %v1317
        %v1342 = vpack.c.b16 %v1320, %v1319
        %v1343 = vpack.c.b16 %v1322, %v1321
        %v1344 = vpack.c.b16 %v1324, %v1323
        %v1345 = vpack.c.b16 %v1326, %v1325
        %v1346 = vpack.c.b16 %v1328, %v1327
        %v1347 = vpack.c.b16 %v1330, %v1329
        %v1348 = vpack.c.b16 %v1332, %v1331
        %v1350 = vsel %vm662, %v1333, 0
        %v1353 = vsel %vm662, %v1334, 0
        %v1356 = vsel %vm662, %v1335, 0
        %v1359 = vsel %vm662, %v1336, 0
        %v1362 = vsel %vm662, %v1337, 0
        %v1365 = vsel %vm662, %v1338, 0
        %v1368 = vsel %vm662, %v1339, 0
        %v1371 = vsel %vm662, %v1340, 0
        %v1374 = vsel %vm662, %v1341, 0
        %v1377 = vsel %vm662, %v1342, 0
        %v1380 = vsel %vm662, %v1343, 0
        %v1383 = vsel %vm662, %v1344, 0
        %v1386 = vsel %vm662, %v1345, 0
        %v1389 = vsel %vm662, %v1346, 0
        %v1392 = vsel %vm662, %v1347, 0
        %v1395 = vsel %vm662, %v1348, 0
        %v1398 = vsel %vm711, %v1300, 0
        %1400 = vmatprep.subr.bf16.mxu0 0
        %1401 = vmatpush1.bf16.msra.mxu0 %v1398
        %1402 = vmatprep.subr.bf16.mxu0 0
        %1403 = vmatpush1.bf16.msra.mxu0 0
        %1404 = vmatprep.subr.bf16.mxu0 0
        %1405 = vmatpush1.bf16.msra.mxu0 0
        %1406 = vmatprep.subr.bf16.mxu0 0
        %1407 = vmatpush1.bf16.msra.mxu0 0
        %1408 = vmatprep.subr.bf16.mxu0 0
        %1409 = vmatpush1.bf16.msra.mxu0 0
        %1410 = vmatprep.subr.bf16.mxu0 0
        %1411 = vmatpush1.bf16.msra.mxu0 0
        %1412 = vmatprep.subr.bf16.mxu0 0
        %1413 = vmatpush1.bf16.msra.mxu0 0
        %1414 = vmatprep.subr.bf16.mxu0 0
        %1415 = vmatpush1.bf16.msra.mxu0 0
        %1416 = vmatprep.subr.bf16.mxu0 0
        %1417 = vmatpush1.bf16.msra.mxu0 0
        %1418 = vmatprep.subr.bf16.mxu0 0
        %1419 = vmatpush1.bf16.msra.mxu0 0
        %1420 = vmatprep.subr.bf16.mxu0 0
        %1421 = vmatpush1.bf16.msra.mxu0 0
        %1422 = vmatprep.subr.bf16.mxu0 0
        %1423 = vmatpush1.bf16.msra.mxu0 0
        %1424 = vmatprep.subr.bf16.mxu0 0
        %1425 = vmatpush1.bf16.msra.mxu0 0
        %1426 = vmatprep.subr.bf16.mxu0 0
        %1427 = vmatpush1.bf16.msra.mxu0 0
        %1428 = vmatprep.subr.bf16.mxu0 0
        %1429 = vmatpush1.bf16.msra.mxu0 0
        %1430 = vmatprep.subr.bf16.mxu0 0
        %1431 = vmatpush1.bf16.msra.mxu0 0
        %1432 = vmatprep.mubr.bf16.mxu0 0
        %1433 = vmatmul.mubr.bf16.gmra.mrb[0].mxu0 %v1350
        %v1434 = vpop.f32.mrb[0].mxu0
        %v1435 = vadd.f32 0.0, %v1434
        %v1436 = vpop.f32.mrb[0].mxu0
        %v1437 = vpop.f32.mrb[0].mxu0
        %v1438 = vadd.f32 0.0, %v1437
        %v1439 = vpop.f32.mrb[0].mxu0
        %1440 = vmatprep.mubr.bf16.mxu0 0
        %1441 = vmatmul.mubr.bf16.gmra.mrb[0].mxu0 %v1353
        %v1442 = vpop.f32.mrb[0].mxu0
        %v1443 = vadd.f32 0.0, %v1442
        %v1444 = vpop.f32.mrb[0].mxu0
        %v1445 = vpop.f32.mrb[0].mxu0
        %v1446 = vadd.f32 0.0, %v1445
        %v1447 = vpop.f32.mrb[0].mxu0
        %1448 = vmatprep.mubr.bf16.mxu0 0
        %1449 = vmatmul.mubr.bf16.gmra.mrb[0].mxu0 %v1356
        %v1450 = vpop.f32.mrb[0].mxu0
        %v1451 = vadd.f32 0.0, %v1450
        %v1452 = vpop.f32.mrb[0].mxu0
        %v1453 = vpop.f32.mrb[0].mxu0
        %v1454 = vadd.f32 0.0, %v1453
        %v1455 = vpop.f32.mrb[0].mxu0
        %1456 = vmatprep.mubr.bf16.mxu0 0
        %1457 = vmatmul.mubr.bf16.gmra.mrb[0].mxu0 %v1359
        %v1458 = vpop.f32.mrb[0].mxu0
        %v1459 = vadd.f32 0.0, %v1458
        %v1460 = vpop.f32.mrb[0].mxu0
        %v1461 = vpop.f32.mrb[0].mxu0
        %v1462 = vadd.f32 0.0, %v1461
        %v1463 = vpop.f32.mrb[0].mxu0
        %1464 = vmatprep.mubr.bf16.mxu0 0
        %1465 = vmatmul.mubr.bf16.gmra.mrb[0].mxu0 %v1362
        %v1466 = vpop.f32.mrb[0].mxu0
        %v1467 = vadd.f32 0.0, %v1466
        %v1468 = vpop.f32.mrb[0].mxu0
        %v1469 = vpop.f32.mrb[0].mxu0
        %v1470 = vadd.f32 0.0, %v1469
        %v1471 = vpop.f32.mrb[0].mxu0
        %1472 = vmatprep.mubr.bf16.mxu0 0
        %1473 = vmatmul.mubr.bf16.gmra.mrb[0].mxu0 %v1365
        %v1474 = vpop.f32.mrb[0].mxu0
        %v1475 = vadd.f32 0.0, %v1474
        %v1476 = vpop.f32.mrb[0].mxu0
        %v1477 = vpop.f32.mrb[0].mxu0
        %v1478 = vadd.f32 0.0, %v1477
        %v1479 = vpop.f32.mrb[0].mxu0
        %1480 = vmatprep.mubr.bf16.mxu0 0
        %1481 = vmatmul.mubr.bf16.gmra.mrb[0].mxu0 %v1368
        %v1482 = vpop.f32.mrb[0].mxu0
        %v1483 = vadd.f32 0.0, %v1482
        %v1484 = vpop.f32.mrb[0].mxu0
        %v1485 = vpop.f32.mrb[0].mxu0
        %v1486 = vadd.f32 0.0, %v1485
        %v1487 = vpop.f32.mrb[0].mxu0
        %1488 = vmatprep.mubr.bf16.mxu0 0
        %1489 = vmatmul.mubr.bf16.gmra.mrb[0].mxu0 %v1371
        %v1490 = vpop.f32.mrb[0].mxu0
        %v1491 = vadd.f32 0.0, %v1490
        %v1492 = vpop.f32.mrb[0].mxu0
        %v1493 = vpop.f32.mrb[0].mxu0
        %v1494 = vadd.f32 0.0, %v1493
        %v1495 = vpop.f32.mrb[0].mxu0
        %1496 = vmatprep.mubr.bf16.mxu0 0
        %1497 = vmatmul.mubr.bf16.gmra.mrb[0].mxu0 %v1374
        %v1498 = vpop.f32.mrb[0].mxu0
        %v1499 = vadd.f32 0.0, %v1498
        %v1500 = vpop.f32.mrb[0].mxu0
        %v1501 = vpop.f32.mrb[0].mxu0
        %v1502 = vadd.f32 0.0, %v1501
        %v1503 = vpop.f32.mrb[0].mxu0
        %1504 = vmatprep.mubr.bf16.mxu0 0
        %1505 = vmatmul.mubr.bf16.gmra.mrb[0].mxu0 %v1377
        %v1506 = vpop.f32.mrb[0].mxu0
        %v1507 = vadd.f32 0.0, %v1506
        %v1508 = vpop.f32.mrb[0].mxu0
        %v1509 = vpop.f32.mrb[0].mxu0
        %v1510 = vadd.f32 0.0, %v1509
        %v1511 = vpop.f32.mrb[0].mxu0
        %1512 = vmatprep.mubr.bf16.mxu0 0
        %1513 = vmatmul.mubr.bf16.gmra.mrb[0].mxu0 %v1380
        %v1514 = vpop.f32.mrb[0].mxu0
        %v1515 = vadd.f32 0.0, %v1514
        %v1516 = vpop.f32.mrb[0].mxu0
        %v1517 = vpop.f32.mrb[0].mxu0
        %v1518 = vadd.f32 0.0, %v1517
        %v1519 = vpop.f32.mrb[0].mxu0
        %1520 = vmatprep.mubr.bf16.mxu0 0
        %1521 = vmatmul.mubr.bf16.gmra.mrb[0].mxu0 %v1383
        %v1522 = vpop.f32.mrb[0].mxu0
        %v1523 = vadd.f32 0.0, %v1522
        %v1524 = vpop.f32.mrb[0].mxu0
        %v1525 = vpop.f32.mrb[0].mxu0
        %v1526 = vadd.f32 0.0, %v1525
        %v1527 = vpop.f32.mrb[0].mxu0
        %1528 = vmatprep.mubr.bf16.mxu0 0
        %1529 = vmatmul.mubr.bf16.gmra.mrb[0].mxu0 %v1386
        %v1530 = vpop.f32.mrb[0].mxu0
        %v1531 = vadd.f32 0.0, %v1530
        %v1532 = vpop.f32.mrb[0].mxu0
        %v1533 = vpop.f32.mrb[0].mxu0
        %v1534 = vadd.f32 0.0, %v1533
        %v1535 = vpop.f32.mrb[0].mxu0
        %1536 = vmatprep.mubr.bf16.mxu0 0
        %1537 = vmatmul.mubr.bf16.gmra.mrb[0].mxu0 %v1389
        %v1538 = vpop.f32.mrb[0].mxu0
        %v1539 = vadd.f32 0.0, %v1538
        %v1540 = vpop.f32.mrb[0].mxu0
        %v1541 = vpop.f32.mrb[0].mxu0
        %v1542 = vadd.f32 0.0, %v1541
        %v1543 = vpop.f32.mrb[0].mxu0
        %1544 = vmatprep.mubr.bf16.mxu0 0
        %1545 = vmatmul.mubr.bf16.gmra.mrb[0].mxu0 %v1392
        %v1546 = vpop.f32.mrb[0].mxu0
        %v1547 = vadd.f32 0.0, %v1546
        %v1548 = vpop.f32.mrb[0].mxu0
        %v1549 = vpop.f32.mrb[0].mxu0
        %v1550 = vadd.f32 0.0, %v1549
        %v1551 = vpop.f32.mrb[0].mxu0
        %1552 = vmatprep.mubr.bf16.mxu0 0
        %1553 = vmatmul.mubr.bf16.gmra.mrb[0].mxu0 %v1395
        %v1554 = vpop.f32.mrb[0].mxu0
        %v1555 = vadd.f32 0.0, %v1554
        %v1556 = vpop.f32.mrb[0].mxu0
        %v1557 = vpop.f32.mrb[0].mxu0
        %v1558 = vadd.f32 0.0, %v1557
        %v1559 = vpop.f32.mrb[0].mxu0
        %1560 = vdwg.mxu0
        %v1561 = vadd.f32 %v1042, %v1435
        %v1562 = vadd.f32 %v1045, %v1438
        %v1563 = vadd.f32 %v1050, %v1443
        %v1564 = vadd.f32 %v1053, %v1446
        %v1565 = vadd.f32 %v1058, %v1451
        %v1566 = vadd.f32 %v1061, %v1454
        %v1567 = vadd.f32 %v1066, %v1459
        %v1568 = vadd.f32 %v1069, %v1462
        %v1569 = vadd.f32 %v1074, %v1467
        %v1570 = vadd.f32 %v1077, %v1470
        %v1571 = vadd.f32 %v1082, %v1475
        %v1572 = vadd.f32 %v1085, %v1478
        %v1573 = vadd.f32 %v1090, %v1483
        %v1574 = vadd.f32 %v1093, %v1486
        %v1575 = vadd.f32 %v1098, %v1491
        %v1576 = vadd.f32 %v1101, %v1494
        %v1577 = vadd.f32 %v1106, %v1499
        %v1578 = vadd.f32 %v1109, %v1502
        %v1579 = vadd.f32 %v1114, %v1507
        %v1580 = vadd.f32 %v1117, %v1510
        %v1581 = vadd.f32 %v1122, %v1515
        %v1582 = vadd.f32 %v1125, %v1518
        %v1583 = vadd.f32 %v1130, %v1523
        %v1584 = vadd.f32 %v1133, %v1526
        %v1585 = vadd.f32 %v1138, %v1531
        %v1586 = vadd.f32 %v1141, %v1534
        %v1587 = vadd.f32 %v1146, %v1539
        %v1588 = vadd.f32 %v1149, %v1542
        %v1589 = vadd.f32 %v1154, %v1547
        %v1590 = vadd.f32 %v1157, %v1550
        %v1591 = vadd.f32 %v1162, %v1555
        %v1592 = vadd.f32 %v1165, %v1558
        %s1593 = scalar_lea.vmem %s1, 12
        %v1594 = vld [vmem:[%s1593] sm:$0xf]
        %v1597 = vunpack.c.l.b16 %v218
        %v1598 = vunpack.c.l.b16 %v219
        %v1599 = vpack.c.b16 %v1598, %v1597
        %v1601 = vsel %vm662, %v1599, 0
        %v1604 = vsel %vm711, %v1594, 0
        %1606 = vmatprep.subr.bf16.mxu0 0
        %1607 = vmatpush1.bf16.msra.mxu0 %v1604
        %1608 = vmatprep.subr.bf16.mxu0 0
        %1609 = vmatpush1.bf16.msra.mxu0 0
        %1610 = vmatprep.subr.bf16.mxu0 0
        %1611 = vmatpush1.bf16.msra.mxu0 0
        %1612 = vmatprep.subr.bf16.mxu0 0
        %1613 = vmatpush1.bf16.msra.mxu0 0
        %1614 = vmatprep.subr.bf16.mxu0 0
        %1615 = vmatpush1.bf16.msra.mxu0 0
        %1616 = vmatprep.subr.bf16.mxu0 0
        %1617 = vmatpush1.bf16.msra.mxu0 0
        %1618 = vmatprep.subr.bf16.mxu0 0
        %1619 = vmatpush1.bf16.msra.mxu0 0
        %1620 = vmatprep.subr.bf16.mxu0 0
        %1621 = vmatpush1.bf16.msra.mxu0 0
        %1622 = vmatprep.subr.bf16.mxu0 0
        %1623 = vmatpush1.bf16.msra.mxu0 0
        %1624 = vmatprep.subr.bf16.mxu0 0
        %1625 = vmatpush1.bf16.msra.mxu0 0
        %1626 = vmatprep.subr.bf16.mxu0 0
        %1627 = vmatpush1.bf16.msra.mxu0 0
        %1628 = vmatprep.subr.bf16.mxu0 0
        %1629 = vmatpush1.bf16.msra.mxu0 0
        %1630 = vmatprep.subr.bf16.mxu0 0
        %1631 = vmatpush1.bf16.msra.mxu0 0
        %1632 = vmatprep.subr.bf16.mxu0 0
        %1633 = vmatpush1.bf16.msra.mxu0 0
        %1634 = vmatprep.subr.bf16.mxu0 0
        %1635 = vmatpush1.bf16.msra.mxu0 0
        %1636 = vmatprep.subr.bf16.mxu0 0
        %1637 = vmatpush1.bf16.msra.mxu0 0
        %1638 = vmatprep.mubr.bf16.mxu0 0
        %1639 = vmatmul.mubr.bf16.gmra.mrb[0].mxu0 %v960
        %v1640 = vpop.f32.mrb[0].mxu0
        %v1641 = vadd.f32 0.0, %v1640
        %v1642 = vpop.f32.mrb[0].mxu0
        %v1643 = vpop.f32.mrb[0].mxu0
        %v1644 = vadd.f32 0.0, %v1643
        %v1645 = vpop.f32.mrb[0].mxu0
        %1646 = vmatprep.mubr.bf16.mxu0 0
        %1647 = vmatmul.mubr.bf16.gmra.mrb[0].mxu0 %v963
        %v1648 = vpop.f32.mrb[0].mxu0
        %v1649 = vadd.f32 0.0, %v1648
        %v1650 = vpop.f32.mrb[0].mxu0
        %v1651 = vpop.f32.mrb[0].mxu0
        %v1652 = vadd.f32 0.0, %v1651
        %v1653 = vpop.f32.mrb[0].mxu0
        %1654 = vmatprep.mubr.bf16.mxu0 0
        %1655 = vmatmul.mubr.bf16.gmra.mrb[0].mxu0 %v966
        %v1656 = vpop.f32.mrb[0].mxu0
        %v1657 = vadd.f32 0.0, %v1656
        %v1658 = vpop.f32.mrb[0].mxu0
        %v1659 = vpop.f32.mrb[0].mxu0
        %v1660 = vadd.f32 0.0, %v1659
        %v1661 = vpop.f32.mrb[0].mxu0
        %1662 = vmatprep.mubr.bf16.mxu0 0
        %1663 = vmatmul.mubr.bf16.gmra.mrb[0].mxu0 %v969
        %v1664 = vpop.f32.mrb[0].mxu0
        %v1665 = vadd.f32 0.0, %v1664
        %v1666 = vpop.f32.mrb[0].mxu0
        %v1667 = vpop.f32.mrb[0].mxu0
        %v1668 = vadd.f32 0.0, %v1667
        %v1669 = vpop.f32.mrb[0].mxu0
        %1670 = vmatprep.mubr.bf16.mxu0 0
        %1671 = vmatmul.mubr.bf16.gmra.mrb[0].mxu0 %v972
        %v1672 = vpop.f32.mrb[0].mxu0
        %v1673 = vadd.f32 0.0, %v1672
        %v1674 = vpop.f32.mrb[0].mxu0
        %v1675 = vpop.f32.mrb[0].mxu0
        %v1676 = vadd.f32 0.0, %v1675
        %v1677 = vpop.f32.mrb[0].mxu0
        %1678 = vmatprep.mubr.bf16.mxu0 0
        %1679 = vmatmul.mubr.bf16.gmra.mrb[0].mxu0 %v975
        %v1680 = vpop.f32.mrb[0].mxu0
        %v1681 = vadd.f32 0.0, %v1680
        %v1682 = vpop.f32.mrb[0].mxu0
        %v1683 = vpop.f32.mrb[0].mxu0
        %v1684 = vadd.f32 0.0, %v1683
        %v1685 = vpop.f32.mrb[0].mxu0
        %1686 = vmatprep.mubr.bf16.mxu0 0
        %1687 = vmatmul.mubr.bf16.gmra.mrb[0].mxu0 %v978
        %v1688 = vpop.f32.mrb[0].mxu0
        %v1689 = vadd.f32 0.0, %v1688
        %v1690 = vpop.f32.mrb[0].mxu0
        %v1691 = vpop.f32.mrb[0].mxu0
        %v1692 = vadd.f32 0.0, %v1691
        %v1693 = vpop.f32.mrb[0].mxu0
        %1694 = vmatprep.mubr.bf16.mxu0 0
        %1695 = vmatmul.mubr.bf16.gmra.mrb[0].mxu0 %v981
        %v1696 = vpop.f32.mrb[0].mxu0
        %v1697 = vadd.f32 0.0, %v1696
        %v1698 = vpop.f32.mrb[0].mxu0
        %v1699 = vpop.f32.mrb[0].mxu0
        %v1700 = vadd.f32 0.0, %v1699
        %v1701 = vpop.f32.mrb[0].mxu0
        %1702 = vmatprep.mubr.bf16.mxu0 0
        %1703 = vmatmul.mubr.bf16.gmra.mrb[0].mxu0 %v984
        %v1704 = vpop.f32.mrb[0].mxu0
        %v1705 = vadd.f32 0.0, %v1704
        %v1706 = vpop.f32.mrb[0].mxu0
        %v1707 = vpop.f32.mrb[0].mxu0
        %v1708 = vadd.f32 0.0, %v1707
        %v1709 = vpop.f32.mrb[0].mxu0
        %1710 = vmatprep.mubr.bf16.mxu0 0
        %1711 = vmatmul.mubr.bf16.gmra.mrb[0].mxu0 %v987
        %v1712 = vpop.f32.mrb[0].mxu0
        %v1713 = vadd.f32 0.0, %v1712
        %v1714 = vpop.f32.mrb[0].mxu0
        %v1715 = vpop.f32.mrb[0].mxu0
        %v1716 = vadd.f32 0.0, %v1715
        %v1717 = vpop.f32.mrb[0].mxu0
        %1718 = vmatprep.mubr.bf16.mxu0 0
        %1719 = vmatmul.mubr.bf16.gmra.mrb[0].mxu0 %v990
        %v1720 = vpop.f32.mrb[0].mxu0
        %v1721 = vadd.f32 0.0, %v1720
        %v1722 = vpop.f32.mrb[0].mxu0
        %v1723 = vpop.f32.mrb[0].mxu0
        %v1724 = vadd.f32 0.0, %v1723
        %v1725 = vpop.f32.mrb[0].mxu0
        %1726 = vmatprep.mubr.bf16.mxu0 0
        %1727 = vmatmul.mubr.bf16.gmra.mrb[0].mxu0 %v993
        %v1728 = vpop.f32.mrb[0].mxu0
        %v1729 = vadd.f32 0.0, %v1728
        %v1730 = vpop.f32.mrb[0].mxu0
        %v1731 = vpop.f32.mrb[0].mxu0
        %v1732 = vadd.f32 0.0, %v1731
        %v1733 = vpop.f32.mrb[0].mxu0
        %1734 = vmatprep.mubr.bf16.mxu0 0
        %1735 = vmatmul.mubr.bf16.gmra.mrb[0].mxu0 %v996
        %v1736 = vpop.f32.mrb[0].mxu0
        %v1737 = vadd.f32 0.0, %v1736
        %v1738 = vpop.f32.mrb[0].mxu0
        %v1739 = vpop.f32.mrb[0].mxu0
        %v1740 = vadd.f32 0.0, %v1739
        %v1741 = vpop.f32.mrb[0].mxu0
        %1742 = vmatprep.mubr.bf16.mxu0 0
        %1743 = vmatmul.mubr.bf16.gmra.mrb[0].mxu0 %v999
        %v1744 = vpop.f32.mrb[0].mxu0
        %v1745 = vadd.f32 0.0, %v1744
        %v1746 = vpop.f32.mrb[0].mxu0
        %v1747 = vpop.f32.mrb[0].mxu0
        %v1748 = vadd.f32 0.0, %v1747
        %v1749 = vpop.f32.mrb[0].mxu0
        %1750 = vmatprep.mubr.bf16.mxu0 0
        %1751 = vmatmul.mubr.bf16.gmra.mrb[0].mxu0 %v1002
        %v1752 = vpop.f32.mrb[0].mxu0
        %v1753 = vadd.f32 0.0, %v1752
        %v1754 = vpop.f32.mrb[0].mxu0
        %v1755 = vpop.f32.mrb[0].mxu0
        %v1756 = vadd.f32 0.0, %v1755
        %v1757 = vpop.f32.mrb[0].mxu0
        %1758 = vmatprep.mubr.bf16.mxu0 0
        %1759 = vmatmul.mubr.bf16.gmra.mrb[0].mxu0 %v1601
        %v1760 = vpop.f32.mrb[0].mxu0
        %v1761 = vadd.f32 0.0, %v1760
        %v1762 = vpop.f32.mrb[0].mxu0
        %v1763 = vpop.f32.mrb[0].mxu0
        %v1764 = vadd.f32 0.0, %v1763
        %v1765 = vpop.f32.mrb[0].mxu0
        %1766 = vdwg.mxu0
        %v1767 = vadd.f32 %v1561, %v1641
        %v1768 = vadd.f32 %v1562, %v1644
        %v1769 = vadd.f32 %v1563, %v1649
        %v1770 = vadd.f32 %v1564, %v1652
        %v1771 = vadd.f32 %v1565, %v1657
        %v1772 = vadd.f32 %v1566, %v1660
        %v1773 = vadd.f32 %v1567, %v1665
        %v1774 = vadd.f32 %v1568, %v1668
        %v1775 = vadd.f32 %v1569, %v1673
        %v1776 = vadd.f32 %v1570, %v1676
        %v1777 = vadd.f32 %v1571, %v1681
        %v1778 = vadd.f32 %v1572, %v1684
        %v1779 = vadd.f32 %v1573, %v1689
        %v1780 = vadd.f32 %v1574, %v1692
        %v1781 = vadd.f32 %v1575, %v1697
        %v1782 = vadd.f32 %v1576, %v1700
        %v1783 = vadd.f32 %v1577, %v1705
        %v1784 = vadd.f32 %v1578, %v1708
        %v1785 = vadd.f32 %v1579, %v1713
        %v1786 = vadd.f32 %v1580, %v1716
        %v1787 = vadd.f32 %v1581, %v1721
        %v1788 = vadd.f32 %v1582, %v1724
        %v1789 = vadd.f32 %v1583, %v1729
        %v1790 = vadd.f32 %v1584, %v1732
        %v1791 = vadd.f32 %v1585, %v1737
        %v1792 = vadd.f32 %v1586, %v1740
        %v1793 = vadd.f32 %v1587, %v1745
        %v1794 = vadd.f32 %v1588, %v1748
        %v1795 = vadd.f32 %v1589, %v1753
        %v1796 = vadd.f32 %v1590, %v1756
        %v1797 = vadd.f32 %v1591, %v1761
        %v1798 = vadd.f32 %v1592, %v1764
        %v1800 = vshrl.u32 %v218, 16
        %v1802 = vrot.slane %v1800, 4
        %v1803 = vshll.u32 %v218, 16
        %v1805 = vrot.slane %v1803, 5
        %v1806 = vor.u32 %v1802, %v1805
        %v1807 = vrot.slane %v1806, 4
        %v1809 = vshll.u32 %v219, 16
        %v1811 = vrot.slane %v1809, 5
        %v1812 = vsel %vm227, %v1807, %v1811
        %v1813 = vshrl.u32 %v219, 16
        %v1815 = vrot.slane %v1813, 4
        %v1816 = vor.u32 %v1815, %v1811
        %v1817 = vrot.slane %v1816, 4
        %v1819 = vshll.u32 %v220, 16
        %v1821 = vrot.slane %v1819, 5
        %v1822 = vsel %vm227, %v1817, %v1821
        %s1823 = scalar_lea.vmem %s1, 16
        %v1824 = vld [vmem:[%s1823] sm:$0xf]
        %v1825 = vunpack.c.l.b16 %v1812
        %v1826 = vunpack.c.l.b16 %v1822
        %v1827 = vpack.c.b16 %v1826, %v1825
        %v1829 = vsel %vm662, %v1827, 0
        %v1832 = vsel %vm711, %v1824, 0
        %1834 = vmatprep.subr.bf16.mxu0 0
        %1835 = vmatpush1.bf16.msra.mxu0 %v1832
        %1836 = vmatprep.subr.bf16.mxu0 0
        %1837 = vmatpush1.bf16.msra.mxu0 0
        %1838 = vmatprep.subr.bf16.mxu0 0
        %1839 = vmatpush1.bf16.msra.mxu0 0
        %1840 = vmatprep.subr.bf16.mxu0 0
        %1841 = vmatpush1.bf16.msra.mxu0 0
        %1842 = vmatprep.subr.bf16.mxu0 0
        %1843 = vmatpush1.bf16.msra.mxu0 0
        %1844 = vmatprep.subr.bf16.mxu0 0
        %1845 = vmatpush1.bf16.msra.mxu0 0
        %1846 = vmatprep.subr.bf16.mxu0 0
        %1847 = vmatpush1.bf16.msra.mxu0 0
        %1848 = vmatprep.subr.bf16.mxu0 0
        %1849 = vmatpush1.bf16.msra.mxu0 0
        %1850 = vmatprep.subr.bf16.mxu0 0
        %1851 = vmatpush1.bf16.msra.mxu0 0
        %1852 = vmatprep.subr.bf16.mxu0 0
        %1853 = vmatpush1.bf16.msra.mxu0 0
        %1854 = vmatprep.subr.bf16.mxu0 0
        %1855 = vmatpush1.bf16.msra.mxu0 0
        %1856 = vmatprep.subr.bf16.mxu0 0
        %1857 = vmatpush1.bf16.msra.mxu0 0
        %1858 = vmatprep.subr.bf16.mxu0 0
        %1859 = vmatpush1.bf16.msra.mxu0 0
        %1860 = vmatprep.subr.bf16.mxu0 0
        %1861 = vmatpush1.bf16.msra.mxu0 0
        %1862 = vmatprep.subr.bf16.mxu0 0
        %1863 = vmatpush1.bf16.msra.mxu0 0
        %1864 = vmatprep.subr.bf16.mxu0 0
        %1865 = vmatpush1.bf16.msra.mxu0 0
        %1866 = vmatprep.mubr.bf16.mxu0 0
        %1867 = vmatmul.mubr.bf16.gmra.mrb[0].mxu0 %v667
        %v1868 = vpop.f32.mrb[0].mxu0
        %v1869 = vadd.f32 0.0, %v1868
        %v1870 = vpop.f32.mrb[0].mxu0
        %v1871 = vpop.f32.mrb[0].mxu0
        %v1872 = vadd.f32 0.0, %v1871
        %v1873 = vpop.f32.mrb[0].mxu0
        %1874 = vmatprep.mubr.bf16.mxu0 0
        %1875 = vmatmul.mubr.bf16.gmra.mrb[0].mxu0 %v670
        %v1876 = vpop.f32.mrb[0].mxu0
        %v1877 = vadd.f32 0.0, %v1876
        %v1878 = vpop.f32.mrb[0].mxu0
        %v1879 = vpop.f32.mrb[0].mxu0
        %v1880 = vadd.f32 0.0, %v1879
        %v1881 = vpop.f32.mrb[0].mxu0
        %1882 = vmatprep.mubr.bf16.mxu0 0
        %1883 = vmatmul.mubr.bf16.gmra.mrb[0].mxu0 %v673
        %v1884 = vpop.f32.mrb[0].mxu0
        %v1885 = vadd.f32 0.0, %v1884
        %v1886 = vpop.f32.mrb[0].mxu0
        %v1887 = vpop.f32.mrb[0].mxu0
        %v1888 = vadd.f32 0.0, %v1887
        %v1889 = vpop.f32.mrb[0].mxu0
        %1890 = vmatprep.mubr.bf16.mxu0 0
        %1891 = vmatmul.mubr.bf16.gmra.mrb[0].mxu0 %v676
        %v1892 = vpop.f32.mrb[0].mxu0
        %v1893 = vadd.f32 0.0, %v1892
        %v1894 = vpop.f32.mrb[0].mxu0
        %v1895 = vpop.f32.mrb[0].mxu0
        %v1896 = vadd.f32 0.0, %v1895
        %v1897 = vpop.f32.mrb[0].mxu0
        %1898 = vmatprep.mubr.bf16.mxu0 0
        %1899 = vmatmul.mubr.bf16.gmra.mrb[0].mxu0 %v679
        %v1900 = vpop.f32.mrb[0].mxu0
        %v1901 = vadd.f32 0.0, %v1900
        %v1902 = vpop.f32.mrb[0].mxu0
        %v1903 = vpop.f32.mrb[0].mxu0
        %v1904 = vadd.f32 0.0, %v1903
        %v1905 = vpop.f32.mrb[0].mxu0
        %1906 = vmatprep.mubr.bf16.mxu0 0
        %1907 = vmatmul.mubr.bf16.gmra.mrb[0].mxu0 %v682
        %v1908 = vpop.f32.mrb[0].mxu0
        %v1909 = vadd.f32 0.0, %v1908
        %v1910 = vpop.f32.mrb[0].mxu0
        %v1911 = vpop.f32.mrb[0].mxu0
        %v1912 = vadd.f32 0.0, %v1911
        %v1913 = vpop.f32.mrb[0].mxu0
        %1914 = vmatprep.mubr.bf16.mxu0 0
        %1915 = vmatmul.mubr.bf16.gmra.mrb[0].mxu0 %v685
        %v1916 = vpop.f32.mrb[0].mxu0
        %v1917 = vadd.f32 0.0, %v1916
        %v1918 = vpop.f32.mrb[0].mxu0
        %v1919 = vpop.f32.mrb[0].mxu0
        %v1920 = vadd.f32 0.0, %v1919
        %v1921 = vpop.f32.mrb[0].mxu0
        %1922 = vmatprep.mubr.bf16.mxu0 0
        %1923 = vmatmul.mubr.bf16.gmra.mrb[0].mxu0 %v688
        %v1924 = vpop.f32.mrb[0].mxu0
        %v1925 = vadd.f32 0.0, %v1924
        %v1926 = vpop.f32.mrb[0].mxu0
        %v1927 = vpop.f32.mrb[0].mxu0
        %v1928 = vadd.f32 0.0, %v1927
        %v1929 = vpop.f32.mrb[0].mxu0
        %1930 = vmatprep.mubr.bf16.mxu0 0
        %1931 = vmatmul.mubr.bf16.gmra.mrb[0].mxu0 %v691
        %v1932 = vpop.f32.mrb[0].mxu0
        %v1933 = vadd.f32 0.0, %v1932
        %v1934 = vpop.f32.mrb[0].mxu0
        %v1935 = vpop.f32.mrb[0].mxu0
        %v1936 = vadd.f32 0.0, %v1935
        %v1937 = vpop.f32.mrb[0].mxu0
        %1938 = vmatprep.mubr.bf16.mxu0 0
        %1939 = vmatmul.mubr.bf16.gmra.mrb[0].mxu0 %v694
        %v1940 = vpop.f32.mrb[0].mxu0
        %v1941 = vadd.f32 0.0, %v1940
        %v1942 = vpop.f32.mrb[0].mxu0
        %v1943 = vpop.f32.mrb[0].mxu0
        %v1944 = vadd.f32 0.0, %v1943
        %v1945 = vpop.f32.mrb[0].mxu0
        %1946 = vmatprep.mubr.bf16.mxu0 0
        %1947 = vmatmul.mubr.bf16.gmra.mrb[0].mxu0 %v697
        %v1948 = vpop.f32.mrb[0].mxu0
        %v1949 = vadd.f32 0.0, %v1948
        %v1950 = vpop.f32.mrb[0].mxu0
        %v1951 = vpop.f32.mrb[0].mxu0
        %v1952 = vadd.f32 0.0, %v1951
        %v1953 = vpop.f32.mrb[0].mxu0
        %1954 = vmatprep.mubr.bf16.mxu0 0
        %1955 = vmatmul.mubr.bf16.gmra.mrb[0].mxu0 %v700
        %v1956 = vpop.f32.mrb[0].mxu0
        %v1957 = vadd.f32 0.0, %v1956
        %v1958 = vpop.f32.mrb[0].mxu0
        %v1959 = vpop.f32.mrb[0].mxu0
        %v1960 = vadd.f32 0.0, %v1959
        %v1961 = vpop.f32.mrb[0].mxu0
        %1962 = vmatprep.mubr.bf16.mxu0 0
        %1963 = vmatmul.mubr.bf16.gmra.mrb[0].mxu0 %v703
        %v1964 = vpop.f32.mrb[0].mxu0
        %v1965 = vadd.f32 0.0, %v1964
        %v1966 = vpop.f32.mrb[0].mxu0
        %v1967 = vpop.f32.mrb[0].mxu0
        %v1968 = vadd.f32 0.0, %v1967
        %v1969 = vpop.f32.mrb[0].mxu0
        %1970 = vmatprep.mubr.bf16.mxu0 0
        %1971 = vmatmul.mubr.bf16.gmra.mrb[0].mxu0 %v706
        %v1972 = vpop.f32.mrb[0].mxu0
        %v1973 = vadd.f32 0.0, %v1972
        %v1974 = vpop.f32.mrb[0].mxu0
        %v1975 = vpop.f32.mrb[0].mxu0
        %v1976 = vadd.f32 0.0, %v1975
        %v1977 = vpop.f32.mrb[0].mxu0
        %1978 = vmatprep.mubr.bf16.mxu0 0
        %1979 = vmatmul.mubr.bf16.gmra.mrb[0].mxu0 %v709
        %v1980 = vpop.f32.mrb[0].mxu0
        %v1981 = vadd.f32 0.0, %v1980
        %v1982 = vpop.f32.mrb[0].mxu0
        %v1983 = vpop.f32.mrb[0].mxu0
        %v1984 = vadd.f32 0.0, %v1983
        %v1985 = vpop.f32.mrb[0].mxu0
        %1986 = vmatprep.mubr.bf16.mxu0 0
        %1987 = vmatmul.mubr.bf16.gmra.mrb[0].mxu0 %v1829
        %v1988 = vpop.f32.mrb[0].mxu0
        %v1989 = vadd.f32 0.0, %v1988
        %v1990 = vpop.f32.mrb[0].mxu0
        %v1991 = vpop.f32.mrb[0].mxu0
        %v1992 = vadd.f32 0.0, %v1991
        %v1993 = vpop.f32.mrb[0].mxu0
        %1994 = vdwg.mxu0
        %v1995 = vadd.f32 %v1767, %v1869
        %v1996 = vadd.f32 %v1768, %v1872
        %v1997 = vadd.f32 %v1769, %v1877
        %v1998 = vadd.f32 %v1770, %v1880
        %v1999 = vadd.f32 %v1771, %v1885
        %v2000 = vadd.f32 %v1772, %v1888
        %v2001 = vadd.f32 %v1773, %v1893
        %v2002 = vadd.f32 %v1774, %v1896
        %v2003 = vadd.f32 %v1775, %v1901
        %v2004 = vadd.f32 %v1776, %v1904
        %v2005 = vadd.f32 %v1777, %v1909
        %v2006 = vadd.f32 %v1778, %v1912
        %v2007 = vadd.f32 %v1779, %v1917
        %v2008 = vadd.f32 %v1780, %v1920
        %v2009 = vadd.f32 %v1781, %v1925
        %v2010 = vadd.f32 %v1782, %v1928
        %v2011 = vadd.f32 %v1783, %v1933
        %v2012 = vadd.f32 %v1784, %v1936
        %v2013 = vadd.f32 %v1785, %v1941
        %v2014 = vadd.f32 %v1786, %v1944
        %v2015 = vadd.f32 %v1787, %v1949
        %v2016 = vadd.f32 %v1788, %v1952
        %v2017 = vadd.f32 %v1789, %v1957
        %v2018 = vadd.f32 %v1790, %v1960
        %v2019 = vadd.f32 %v1791, %v1965
        %v2020 = vadd.f32 %v1792, %v1968
        %v2021 = vadd.f32 %v1793, %v1973
        %v2022 = vadd.f32 %v1794, %v1976
        %v2023 = vadd.f32 %v1795, %v1981
        %v2024 = vadd.f32 %v1796, %v1984
        %v2025 = vadd.f32 %v1797, %v1989
        %v2026 = vadd.f32 %v1798, %v1992
        %v2028 = vrot.slane %v218, 5
        %v2029 = vrot.slane %v2028, 4
        %v2030 = vrot.slane %v219, 5
        %v2031 = vsel %vm1186, %v2029, %v2030
        %v2032 = vrot.slane %v2030, 4
        %v2033 = vrot.slane %v220, 5
        %v2034 = vsel %vm1186, %v2032, %v2033
        %s2035 = scalar_lea.vmem %s1, 20
        %v2036 = vld [vmem:[%s2035] sm:$0xf]
        %v2037 = vunpack.c.l.b16 %v2031
        %v2038 = vunpack.c.l.b16 %v2034
        %v2039 = vpack.c.b16 %v2038, %v2037
        %v2041 = vsel %vm662, %v2039, 0
        %v2044 = vsel %vm711, %v2036, 0
        %2046 = vmatprep.subr.bf16.mxu0 0
        %2047 = vmatpush1.bf16.msra.mxu0 %v2044
        %2048 = vmatprep.subr.bf16.mxu0 0
        %2049 = vmatpush1.bf16.msra.mxu0 0
        %2050 = vmatprep.subr.bf16.mxu0 0
        %2051 = vmatpush1.bf16.msra.mxu0 0
        %2052 = vmatprep.subr.bf16.mxu0 0
        %2053 = vmatpush1.bf16.msra.mxu0 0
        %2054 = vmatprep.subr.bf16.mxu0 0
        %2055 = vmatpush1.bf16.msra.mxu0 0
        %2056 = vmatprep.subr.bf16.mxu0 0
        %2057 = vmatpush1.bf16.msra.mxu0 0
        %2058 = vmatprep.subr.bf16.mxu0 0
        %2059 = vmatpush1.bf16.msra.mxu0 0
        %2060 = vmatprep.subr.bf16.mxu0 0
        %2061 = vmatpush1.bf16.msra.mxu0 0
        %2062 = vmatprep.subr.bf16.mxu0 0
        %2063 = vmatpush1.bf16.msra.mxu0 0
        %2064 = vmatprep.subr.bf16.mxu0 0
        %2065 = vmatpush1.bf16.msra.mxu0 0
        %2066 = vmatprep.subr.bf16.mxu0 0
        %2067 = vmatpush1.bf16.msra.mxu0 0
        %2068 = vmatprep.subr.bf16.mxu0 0
        %2069 = vmatpush1.bf16.msra.mxu0 0
        %2070 = vmatprep.subr.bf16.mxu0 0
        %2071 = vmatpush1.bf16.msra.mxu0 0
        %2072 = vmatprep.subr.bf16.mxu0 0
        %2073 = vmatpush1.bf16.msra.mxu0 0
        %2074 = vmatprep.subr.bf16.mxu0 0
        %2075 = vmatpush1.bf16.msra.mxu0 0
        %2076 = vmatprep.subr.bf16.mxu0 0
        %2077 = vmatpush1.bf16.msra.mxu0 0
        %2078 = vmatprep.mubr.bf16.mxu0 0
        %2079 = vmatmul.mubr.bf16.gmra.mrb[0].mxu0 %v1353
        %v2080 = vpop.f32.mrb[0].mxu0
        %v2081 = vadd.f32 0.0, %v2080
        %v2082 = vpop.f32.mrb[0].mxu0
        %v2083 = vpop.f32.mrb[0].mxu0
        %v2084 = vadd.f32 0.0, %v2083
        %v2085 = vpop.f32.mrb[0].mxu0
        %2086 = vmatprep.mubr.bf16.mxu0 0
        %2087 = vmatmul.mubr.bf16.gmra.mrb[0].mxu0 %v1356
        %v2088 = vpop.f32.mrb[0].mxu0
        %v2089 = vadd.f32 0.0, %v2088
        %v2090 = vpop.f32.mrb[0].mxu0
        %v2091 = vpop.f32.mrb[0].mxu0
        %v2092 = vadd.f32 0.0, %v2091
        %v2093 = vpop.f32.mrb[0].mxu0
        %2094 = vmatprep.mubr.bf16.mxu0 0
        %2095 = vmatmul.mubr.bf16.gmra.mrb[0].mxu0 %v1359
        %v2096 = vpop.f32.mrb[0].mxu0
        %v2097 = vadd.f32 0.0, %v2096
        %v2098 = vpop.f32.mrb[0].mxu0
        %v2099 = vpop.f32.mrb[0].mxu0
        %v2100 = vadd.f32 0.0, %v2099
        %v2101 = vpop.f32.mrb[0].mxu0
        %2102 = vmatprep.mubr.bf16.mxu0 0
        %2103 = vmatmul.mubr.bf16.gmra.mrb[0].mxu0 %v1362
        %v2104 = vpop.f32.mrb[0].mxu0
        %v2105 = vadd.f32 0.0, %v2104
        %v2106 = vpop.f32.mrb[0].mxu0
        %v2107 = vpop.f32.mrb[0].mxu0
        %v2108 = vadd.f32 0.0, %v2107
        %v2109 = vpop.f32.mrb[0].mxu0
        %2110 = vmatprep.mubr.bf16.mxu0 0
        %2111 = vmatmul.mubr.bf16.gmra.mrb[0].mxu0 %v1365
        %v2112 = vpop.f32.mrb[0].mxu0
        %v2113 = vadd.f32 0.0, %v2112
        %v2114 = vpop.f32.mrb[0].mxu0
        %v2115 = vpop.f32.mrb[0].mxu0
        %v2116 = vadd.f32 0.0, %v2115
        %v2117 = vpop.f32.mrb[0].mxu0
        %2118 = vmatprep.mubr.bf16.mxu0 0
        %2119 = vmatmul.mubr.bf16.gmra.mrb[0].mxu0 %v1368
        %v2120 = vpop.f32.mrb[0].mxu0
        %v2121 = vadd.f32 0.0, %v2120
        %v2122 = vpop.f32.mrb[0].mxu0
        %v2123 = vpop.f32.mrb[0].mxu0
        %v2124 = vadd.f32 0.0, %v2123
        %v2125 = vpop.f32.mrb[0].mxu0
        %2126 = vmatprep.mubr.bf16.mxu0 0
        %2127 = vmatmul.mubr.bf16.gmra.mrb[0].mxu0 %v1371
        %v2128 = vpop.f32.mrb[0].mxu0
        %v2129 = vadd.f32 0.0, %v2128
        %v2130 = vpop.f32.mrb[0].mxu0
        %v2131 = vpop.f32.mrb[0].mxu0
        %v2132 = vadd.f32 0.0, %v2131
        %v2133 = vpop.f32.mrb[0].mxu0
        %2134 = vmatprep.mubr.bf16.mxu0 0
        %2135 = vmatmul.mubr.bf16.gmra.mrb[0].mxu0 %v1374
        %v2136 = vpop.f32.mrb[0].mxu0
        %v2137 = vadd.f32 0.0, %v2136
        %v2138 = vpop.f32.mrb[0].mxu0
        %v2139 = vpop.f32.mrb[0].mxu0
        %v2140 = vadd.f32 0.0, %v2139
        %v2141 = vpop.f32.mrb[0].mxu0
        %2142 = vmatprep.mubr.bf16.mxu0 0
        %2143 = vmatmul.mubr.bf16.gmra.mrb[0].mxu0 %v1377
        %v2144 = vpop.f32.mrb[0].mxu0
        %v2145 = vadd.f32 0.0, %v2144
        %v2146 = vpop.f32.mrb[0].mxu0
        %v2147 = vpop.f32.mrb[0].mxu0
        %v2148 = vadd.f32 0.0, %v2147
        %v2149 = vpop.f32.mrb[0].mxu0
        %2150 = vmatprep.mubr.bf16.mxu0 0
        %2151 = vmatmul.mubr.bf16.gmra.mrb[0].mxu0 %v1380
        %v2152 = vpop.f32.mrb[0].mxu0
        %v2153 = vadd.f32 0.0, %v2152
        %v2154 = vpop.f32.mrb[0].mxu0
        %v2155 = vpop.f32.mrb[0].mxu0
        %v2156 = vadd.f32 0.0, %v2155
        %v2157 = vpop.f32.mrb[0].mxu0
        %2158 = vmatprep.mubr.bf16.mxu0 0
        %2159 = vmatmul.mubr.bf16.gmra.mrb[0].mxu0 %v1383
        %v2160 = vpop.f32.mrb[0].mxu0
        %v2161 = vadd.f32 0.0, %v2160
        %v2162 = vpop.f32.mrb[0].mxu0
        %v2163 = vpop.f32.mrb[0].mxu0
        %v2164 = vadd.f32 0.0, %v2163
        %v2165 = vpop.f32.mrb[0].mxu0
        %2166 = vmatprep.mubr.bf16.mxu0 0
        %2167 = vmatmul.mubr.bf16.gmra.mrb[0].mxu0 %v1386
        %v2168 = vpop.f32.mrb[0].mxu0
        %v2169 = vadd.f32 0.0, %v2168
        %v2170 = vpop.f32.mrb[0].mxu0
        %v2171 = vpop.f32.mrb[0].mxu0
        %v2172 = vadd.f32 0.0, %v2171
        %v2173 = vpop.f32.mrb[0].mxu0
        %2174 = vmatprep.mubr.bf16.mxu0 0
        %2175 = vmatmul.mubr.bf16.gmra.mrb[0].mxu0 %v1389
        %v2176 = vpop.f32.mrb[0].mxu0
        %v2177 = vadd.f32 0.0, %v2176
        %v2178 = vpop.f32.mrb[0].mxu0
        %v2179 = vpop.f32.mrb[0].mxu0
        %v2180 = vadd.f32 0.0, %v2179
        %v2181 = vpop.f32.mrb[0].mxu0
        %2182 = vmatprep.mubr.bf16.mxu0 0
        %2183 = vmatmul.mubr.bf16.gmra.mrb[0].mxu0 %v1392
        %v2184 = vpop.f32.mrb[0].mxu0
        %v2185 = vadd.f32 0.0, %v2184
        %v2186 = vpop.f32.mrb[0].mxu0
        %v2187 = vpop.f32.mrb[0].mxu0
        %v2188 = vadd.f32 0.0, %v2187
        %v2189 = vpop.f32.mrb[0].mxu0
        %2190 = vmatprep.mubr.bf16.mxu0 0
        %2191 = vmatmul.mubr.bf16.gmra.mrb[0].mxu0 %v1395
        %v2192 = vpop.f32.mrb[0].mxu0
        %v2193 = vadd.f32 0.0, %v2192
        %v2194 = vpop.f32.mrb[0].mxu0
        %v2195 = vpop.f32.mrb[0].mxu0
        %v2196 = vadd.f32 0.0, %v2195
        %v2197 = vpop.f32.mrb[0].mxu0
        %2198 = vmatprep.mubr.bf16.mxu0 0
        %2199 = vmatmul.mubr.bf16.gmra.mrb[0].mxu0 %v2041
        %v2200 = vpop.f32.mrb[0].mxu0
        %v2201 = vadd.f32 0.0, %v2200
        %v2202 = vpop.f32.mrb[0].mxu0
        %v2203 = vpop.f32.mrb[0].mxu0
        %v2204 = vadd.f32 0.0, %v2203
        %v2205 = vpop.f32.mrb[0].mxu0
        %2206 = vdwg.mxu0
        %v2207 = vadd.f32 %v1995, %v2081
        %v2208 = vadd.f32 %v1996, %v2084
        %v2209 = vadd.f32 %v1997, %v2089
        %v2210 = vadd.f32 %v1998, %v2092
        %v2211 = vadd.f32 %v1999, %v2097
        %v2212 = vadd.f32 %v2000, %v2100
        %v2213 = vadd.f32 %v2001, %v2105
        %v2214 = vadd.f32 %v2002, %v2108
        %v2215 = vadd.f32 %v2003, %v2113
        %v2216 = vadd.f32 %v2004, %v2116
        %v2217 = vadd.f32 %v2005, %v2121
        %v2218 = vadd.f32 %v2006, %v2124
        %v2219 = vadd.f32 %v2007, %v2129
        %v2220 = vadd.f32 %v2008, %v2132
        %v2221 = vadd.f32 %v2009, %v2137
        %v2222 = vadd.f32 %v2010, %v2140
        %v2223 = vadd.f32 %v2011, %v2145
        %v2224 = vadd.f32 %v2012, %v2148
        %v2225 = vadd.f32 %v2013, %v2153
        %v2226 = vadd.f32 %v2014, %v2156
        %v2227 = vadd.f32 %v2015, %v2161
        %v2228 = vadd.f32 %v2016, %v2164
        %v2229 = vadd.f32 %v2017, %v2169
        %v2230 = vadd.f32 %v2018, %v2172
        %v2231 = vadd.f32 %v2019, %v2177
        %v2232 = vadd.f32 %v2020, %v2180
        %v2233 = vadd.f32 %v2021, %v2185
        %v2234 = vadd.f32 %v2022, %v2188
        %v2235 = vadd.f32 %v2023, %v2193
        %v2236 = vadd.f32 %v2024, %v2196
        %v2237 = vadd.f32 %v2025, %v2201
        %v2238 = vadd.f32 %v2026, %v2204
        %s2239 = scalar_lea.vmem %s1, 24
        %v2240 = vld [vmem:[%s2239] sm:$0xf]
        %v2243 = vunpack.c.l.b16 %v221
        %v2244 = vunpack.c.l.b16 %v222
        %v2245 = vpack.c.b16 %v2244, %v2243
        %v2247 = vsel %vm662, %v2245, 0
        %v2250 = vsel %vm711, %v2240, 0
        %2252 = vmatprep.subr.bf16.mxu0 0
        %2253 = vmatpush1.bf16.msra.mxu0 %v2250
        %2254 = vmatprep.subr.bf16.mxu0 0
        %2255 = vmatpush1.bf16.msra.mxu0 0
        %2256 = vmatprep.subr.bf16.mxu0 0
        %2257 = vmatpush1.bf16.msra.mxu0 0
        %2258 = vmatprep.subr.bf16.mxu0 0
        %2259 = vmatpush1.bf16.msra.mxu0 0
        %2260 = vmatprep.subr.bf16.mxu0 0
        %2261 = vmatpush1.bf16.msra.mxu0 0
        %2262 = vmatprep.subr.bf16.mxu0 0
        %2263 = vmatpush1.bf16.msra.mxu0 0
        %2264 = vmatprep.subr.bf16.mxu0 0
        %2265 = vmatpush1.bf16.msra.mxu0 0
        %2266 = vmatprep.subr.bf16.mxu0 0
        %2267 = vmatpush1.bf16.msra.mxu0 0
        %2268 = vmatprep.subr.bf16.mxu0 0
        %2269 = vmatpush1.bf16.msra.mxu0 0
        %2270 = vmatprep.subr.bf16.mxu0 0
        %2271 = vmatpush1.bf16.msra.mxu0 0
        %2272 = vmatprep.subr.bf16.mxu0 0
        %2273 = vmatpush1.bf16.msra.mxu0 0
        %2274 = vmatprep.subr.bf16.mxu0 0
        %2275 = vmatpush1.bf16.msra.mxu0 0
        %2276 = vmatprep.subr.bf16.mxu0 0
        %2277 = vmatpush1.bf16.msra.mxu0 0
        %2278 = vmatprep.subr.bf16.mxu0 0
        %2279 = vmatpush1.bf16.msra.mxu0 0
        %2280 = vmatprep.subr.bf16.mxu0 0
        %2281 = vmatpush1.bf16.msra.mxu0 0
        %2282 = vmatprep.subr.bf16.mxu0 0
        %2283 = vmatpush1.bf16.msra.mxu0 0
        %2284 = vmatprep.mubr.bf16.mxu0 0
        %2285 = vmatmul.mubr.bf16.gmra.mrb[0].mxu0 %v963
        %v2286 = vpop.f32.mrb[0].mxu0
        %v2287 = vadd.f32 0.0, %v2286
        %v2288 = vpop.f32.mrb[0].mxu0
        %v2289 = vpop.f32.mrb[0].mxu0
        %v2290 = vadd.f32 0.0, %v2289
        %v2291 = vpop.f32.mrb[0].mxu0
        %2292 = vmatprep.mubr.bf16.mxu0 0
        %2293 = vmatmul.mubr.bf16.gmra.mrb[0].mxu0 %v966
        %v2294 = vpop.f32.mrb[0].mxu0
        %v2295 = vadd.f32 0.0, %v2294
        %v2296 = vpop.f32.mrb[0].mxu0
        %v2297 = vpop.f32.mrb[0].mxu0
        %v2298 = vadd.f32 0.0, %v2297
        %v2299 = vpop.f32.mrb[0].mxu0
        %2300 = vmatprep.mubr.bf16.mxu0 0
        %2301 = vmatmul.mubr.bf16.gmra.mrb[0].mxu0 %v969
        %v2302 = vpop.f32.mrb[0].mxu0
        %v2303 = vadd.f32 0.0, %v2302
        %v2304 = vpop.f32.mrb[0].mxu0
        %v2305 = vpop.f32.mrb[0].mxu0
        %v2306 = vadd.f32 0.0, %v2305
        %v2307 = vpop.f32.mrb[0].mxu0
        %2308 = vmatprep.mubr.bf16.mxu0 0
        %2309 = vmatmul.mubr.bf16.gmra.mrb[0].mxu0 %v972
        %v2310 = vpop.f32.mrb[0].mxu0
        %v2311 = vadd.f32 0.0, %v2310
        %v2312 = vpop.f32.mrb[0].mxu0
        %v2313 = vpop.f32.mrb[0].mxu0
        %v2314 = vadd.f32 0.0, %v2313
        %v2315 = vpop.f32.mrb[0].mxu0
        %2316 = vmatprep.mubr.bf16.mxu0 0
        %2317 = vmatmul.mubr.bf16.gmra.mrb[0].mxu0 %v975
        %v2318 = vpop.f32.mrb[0].mxu0
        %v2319 = vadd.f32 0.0, %v2318
        %v2320 = vpop.f32.mrb[0].mxu0
        %v2321 = vpop.f32.mrb[0].mxu0
        %v2322 = vadd.f32 0.0, %v2321
        %v2323 = vpop.f32.mrb[0].mxu0
        %2324 = vmatprep.mubr.bf16.mxu0 0
        %2325 = vmatmul.mubr.bf16.gmra.mrb[0].mxu0 %v978
        %v2326 = vpop.f32.mrb[0].mxu0
        %v2327 = vadd.f32 0.0, %v2326
        %v2328 = vpop.f32.mrb[0].mxu0
        %v2329 = vpop.f32.mrb[0].mxu0
        %v2330 = vadd.f32 0.0, %v2329
        %v2331 = vpop.f32.mrb[0].mxu0
        %2332 = vmatprep.mubr.bf16.mxu0 0
        %2333 = vmatmul.mubr.bf16.gmra.mrb[0].mxu0 %v981
        %v2334 = vpop.f32.mrb[0].mxu0
        %v2335 = vadd.f32 0.0, %v2334
        %v2336 = vpop.f32.mrb[0].mxu0
        %v2337 = vpop.f32.mrb[0].mxu0
        %v2338 = vadd.f32 0.0, %v2337
        %v2339 = vpop.f32.mrb[0].mxu0
        %2340 = vmatprep.mubr.bf16.mxu0 0
        %2341 = vmatmul.mubr.bf16.gmra.mrb[0].mxu0 %v984
        %v2342 = vpop.f32.mrb[0].mxu0
        %v2343 = vadd.f32 0.0, %v2342
        %v2344 = vpop.f32.mrb[0].mxu0
        %v2345 = vpop.f32.mrb[0].mxu0
        %v2346 = vadd.f32 0.0, %v2345
        %v2347 = vpop.f32.mrb[0].mxu0
        %2348 = vmatprep.mubr.bf16.mxu0 0
        %2349 = vmatmul.mubr.bf16.gmra.mrb[0].mxu0 %v987
        %v2350 = vpop.f32.mrb[0].mxu0
        %v2351 = vadd.f32 0.0, %v2350
        %v2352 = vpop.f32.mrb[0].mxu0
        %v2353 = vpop.f32.mrb[0].mxu0
        %v2354 = vadd.f32 0.0, %v2353
        %v2355 = vpop.f32.mrb[0].mxu0
        %2356 = vmatprep.mubr.bf16.mxu0 0
        %2357 = vmatmul.mubr.bf16.gmra.mrb[0].mxu0 %v990
        %v2358 = vpop.f32.mrb[0].mxu0
        %v2359 = vadd.f32 0.0, %v2358
        %v2360 = vpop.f32.mrb[0].mxu0
        %v2361 = vpop.f32.mrb[0].mxu0
        %v2362 = vadd.f32 0.0, %v2361
        %v2363 = vpop.f32.mrb[0].mxu0
        %2364 = vmatprep.mubr.bf16.mxu0 0
        %2365 = vmatmul.mubr.bf16.gmra.mrb[0].mxu0 %v993
        %v2366 = vpop.f32.mrb[0].mxu0
        %v2367 = vadd.f32 0.0, %v2366
        %v2368 = vpop.f32.mrb[0].mxu0
        %v2369 = vpop.f32.mrb[0].mxu0
        %v2370 = vadd.f32 0.0, %v2369
        %v2371 = vpop.f32.mrb[0].mxu0
        %2372 = vmatprep.mubr.bf16.mxu0 0
        %2373 = vmatmul.mubr.bf16.gmra.mrb[0].mxu0 %v996
        %v2374 = vpop.f32.mrb[0].mxu0
        %v2375 = vadd.f32 0.0, %v2374
        %v2376 = vpop.f32.mrb[0].mxu0
        %v2377 = vpop.f32.mrb[0].mxu0
        %v2378 = vadd.f32 0.0, %v2377
        %v2379 = vpop.f32.mrb[0].mxu0
        %2380 = vmatprep.mubr.bf16.mxu0 0
        %2381 = vmatmul.mubr.bf16.gmra.mrb[0].mxu0 %v999
        %v2382 = vpop.f32.mrb[0].mxu0
        %v2383 = vadd.f32 0.0, %v2382
        %v2384 = vpop.f32.mrb[0].mxu0
        %v2385 = vpop.f32.mrb[0].mxu0
        %v2386 = vadd.f32 0.0, %v2385
        %v2387 = vpop.f32.mrb[0].mxu0
        %2388 = vmatprep.mubr.bf16.mxu0 0
        %2389 = vmatmul.mubr.bf16.gmra.mrb[0].mxu0 %v1002
        %v2390 = vpop.f32.mrb[0].mxu0
        %v2391 = vadd.f32 0.0, %v2390
        %v2392 = vpop.f32.mrb[0].mxu0
        %v2393 = vpop.f32.mrb[0].mxu0
        %v2394 = vadd.f32 0.0, %v2393
        %v2395 = vpop.f32.mrb[0].mxu0
        %2396 = vmatprep.mubr.bf16.mxu0 0
        %2397 = vmatmul.mubr.bf16.gmra.mrb[0].mxu0 %v1601
        %v2398 = vpop.f32.mrb[0].mxu0
        %v2399 = vadd.f32 0.0, %v2398
        %v2400 = vpop.f32.mrb[0].mxu0
        %v2401 = vpop.f32.mrb[0].mxu0
        %v2402 = vadd.f32 0.0, %v2401
        %v2403 = vpop.f32.mrb[0].mxu0
        %2404 = vmatprep.mubr.bf16.mxu0 0
        %2405 = vmatmul.mubr.bf16.gmra.mrb[0].mxu0 %v2247
        %v2406 = vpop.f32.mrb[0].mxu0
        %v2407 = vadd.f32 0.0, %v2406
        %v2408 = vpop.f32.mrb[0].mxu0
        %v2409 = vpop.f32.mrb[0].mxu0
        %v2410 = vadd.f32 0.0, %v2409
        %v2411 = vpop.f32.mrb[0].mxu0
        %2412 = vdwg.mxu0
        %v2413 = vadd.f32 %v2207, %v2287
        %v2414 = vadd.f32 %v2208, %v2290
        %v2415 = vadd.f32 %v2209, %v2295
        %v2416 = vadd.f32 %v2210, %v2298
        %v2417 = vadd.f32 %v2211, %v2303
        %v2418 = vadd.f32 %v2212, %v2306
        %v2419 = vadd.f32 %v2213, %v2311
        %v2420 = vadd.f32 %v2214, %v2314
        %v2421 = vadd.f32 %v2215, %v2319
        %v2422 = vadd.f32 %v2216, %v2322
        %v2423 = vadd.f32 %v2217, %v2327
        %v2424 = vadd.f32 %v2218, %v2330
        %v2425 = vadd.f32 %v2219, %v2335
        %v2426 = vadd.f32 %v2220, %v2338
        %v2427 = vadd.f32 %v2221, %v2343
        %v2428 = vadd.f32 %v2222, %v2346
        %v2429 = vadd.f32 %v2223, %v2351
        %v2430 = vadd.f32 %v2224, %v2354
        %v2431 = vadd.f32 %v2225, %v2359
        %v2432 = vadd.f32 %v2226, %v2362
        %v2433 = vadd.f32 %v2227, %v2367
        %v2434 = vadd.f32 %v2228, %v2370
        %v2435 = vadd.f32 %v2229, %v2375
        %v2436 = vadd.f32 %v2230, %v2378
        %v2437 = vadd.f32 %v2231, %v2383
        %v2438 = vadd.f32 %v2232, %v2386
        %v2439 = vadd.f32 %v2233, %v2391
        %v2440 = vadd.f32 %v2234, %v2394
        %v2441 = vadd.f32 %v2235, %v2399
        %v2442 = vadd.f32 %v2236, %v2402
        %v2443 = vadd.f32 %v2237, %v2407
        %v2444 = vadd.f32 %v2238, %v2410
        %v2446 = vshrl.u32 %v221, 16
        %v2448 = vrot.slane %v2446, 4
        %v2449 = vshll.u32 %v221, 16
        %v2451 = vrot.slane %v2449, 5
        %v2452 = vor.u32 %v2448, %v2451
        %v2453 = vrot.slane %v2452, 4
        %v2455 = vshll.u32 %v222, 16
        %v2457 = vrot.slane %v2455, 5
        %v2458 = vsel %vm227, %v2453, %v2457
        %v2459 = vshrl.u32 %v222, 16
        %v2461 = vrot.slane %v2459, 4
        %v2462 = vor.u32 %v2461, %v2457
        %v2463 = vrot.slane %v2462, 4
        %v2465 = vshll.u32 %v223, 16
        %v2467 = vrot.slane %v2465, 5
        %v2468 = vsel %vm227, %v2463, %v2467
        %s2469 = scalar_lea.vmem %s1, 28
        %v2470 = vld [vmem:[%s2469] sm:$0xf]
        %v2471 = vunpack.c.l.b16 %v2458
        %v2472 = vunpack.c.l.b16 %v2468
        %v2473 = vpack.c.b16 %v2472, %v2471
        %v2475 = vsel %vm662, %v2473, 0
        %v2478 = vsel %vm711, %v2470, 0
        %2480 = vmatprep.subr.bf16.mxu0 0
        %2481 = vmatpush1.bf16.msra.mxu0 %v2478
        %2482 = vmatprep.subr.bf16.mxu0 0
        %2483 = vmatpush1.bf16.msra.mxu0 0
        %2484 = vmatprep.subr.bf16.mxu0 0
        %2485 = vmatpush1.bf16.msra.mxu0 0
        %2486 = vmatprep.subr.bf16.mxu0 0
        %2487 = vmatpush1.bf16.msra.mxu0 0
        %2488 = vmatprep.subr.bf16.mxu0 0
        %2489 = vmatpush1.bf16.msra.mxu0 0
        %2490 = vmatprep.subr.bf16.mxu0 0
        %2491 = vmatpush1.bf16.msra.mxu0 0
        %2492 = vmatprep.subr.bf16.mxu0 0
        %2493 = vmatpush1.bf16.msra.mxu0 0
        %2494 = vmatprep.subr.bf16.mxu0 0
        %2495 = vmatpush1.bf16.msra.mxu0 0
        %2496 = vmatprep.subr.bf16.mxu0 0
        %2497 = vmatpush1.bf16.msra.mxu0 0
        %2498 = vmatprep.subr.bf16.mxu0 0
        %2499 = vmatpush1.bf16.msra.mxu0 0
        %2500 = vmatprep.subr.bf16.mxu0 0
        %2501 = vmatpush1.bf16.msra.mxu0 0
        %2502 = vmatprep.subr.bf16.mxu0 0
        %2503 = vmatpush1.bf16.msra.mxu0 0
        %2504 = vmatprep.subr.bf16.mxu0 0
        %2505 = vmatpush1.bf16.msra.mxu0 0
        %2506 = vmatprep.subr.bf16.mxu0 0
        %2507 = vmatpush1.bf16.msra.mxu0 0
        %2508 = vmatprep.subr.bf16.mxu0 0
        %2509 = vmatpush1.bf16.msra.mxu0 0
        %2510 = vmatprep.subr.bf16.mxu0 0
        %2511 = vmatpush1.bf16.msra.mxu0 0
        %2512 = vmatprep.mubr.bf16.mxu0 0
        %2513 = vmatmul.mubr.bf16.gmra.mrb[0].mxu0 %v670
        %v2514 = vpop.f32.mrb[0].mxu0
        %v2515 = vadd.f32 0.0, %v2514
        %v2516 = vpop.f32.mrb[0].mxu0
        %v2517 = vpop.f32.mrb[0].mxu0
        %v2518 = vadd.f32 0.0, %v2517
        %v2519 = vpop.f32.mrb[0].mxu0
        %2520 = vmatprep.mubr.bf16.mxu0 0
        %2521 = vmatmul.mubr.bf16.gmra.mrb[0].mxu0 %v673
        %v2522 = vpop.f32.mrb[0].mxu0
        %v2523 = vadd.f32 0.0, %v2522
        %v2524 = vpop.f32.mrb[0].mxu0
        %v2525 = vpop.f32.mrb[0].mxu0
        %v2526 = vadd.f32 0.0, %v2525
        %v2527 = vpop.f32.mrb[0].mxu0
        %2528 = vmatprep.mubr.bf16.mxu0 0
        %2529 = vmatmul.mubr.bf16.gmra.mrb[0].mxu0 %v676
        %v2530 = vpop.f32.mrb[0].mxu0
        %v2531 = vadd.f32 0.0, %v2530
        %v2532 = vpop.f32.mrb[0].mxu0
        %v2533 = vpop.f32.mrb[0].mxu0
        %v2534 = vadd.f32 0.0, %v2533
        %v2535 = vpop.f32.mrb[0].mxu0
        %2536 = vmatprep.mubr.bf16.mxu0 0
        %2537 = vmatmul.mubr.bf16.gmra.mrb[0].mxu0 %v679
        %v2538 = vpop.f32.mrb[0].mxu0
        %v2539 = vadd.f32 0.0, %v2538
        %v2540 = vpop.f32.mrb[0].mxu0
        %v2541 = vpop.f32.mrb[0].mxu0
        %v2542 = vadd.f32 0.0, %v2541
        %v2543 = vpop.f32.mrb[0].mxu0
        %2544 = vmatprep.mubr.bf16.mxu0 0
        %2545 = vmatmul.mubr.bf16.gmra.mrb[0].mxu0 %v682
        %v2546 = vpop.f32.mrb[0].mxu0
        %v2547 = vadd.f32 0.0, %v2546
        %v2548 = vpop.f32.mrb[0].mxu0
        %v2549 = vpop.f32.mrb[0].mxu0
        %v2550 = vadd.f32 0.0, %v2549
        %v2551 = vpop.f32.mrb[0].mxu0
        %2552 = vmatprep.mubr.bf16.mxu0 0
        %2553 = vmatmul.mubr.bf16.gmra.mrb[0].mxu0 %v685
        %v2554 = vpop.f32.mrb[0].mxu0
        %v2555 = vadd.f32 0.0, %v2554
        %v2556 = vpop.f32.mrb[0].mxu0
        %v2557 = vpop.f32.mrb[0].mxu0
        %v2558 = vadd.f32 0.0, %v2557
        %v2559 = vpop.f32.mrb[0].mxu0
        %2560 = vmatprep.mubr.bf16.mxu0 0
        %2561 = vmatmul.mubr.bf16.gmra.mrb[0].mxu0 %v688
        %v2562 = vpop.f32.mrb[0].mxu0
        %v2563 = vadd.f32 0.0, %v2562
        %v2564 = vpop.f32.mrb[0].mxu0
        %v2565 = vpop.f32.mrb[0].mxu0
        %v2566 = vadd.f32 0.0, %v2565
        %v2567 = vpop.f32.mrb[0].mxu0
        %2568 = vmatprep.mubr.bf16.mxu0 0
        %2569 = vmatmul.mubr.bf16.gmra.mrb[0].mxu0 %v691
        %v2570 = vpop.f32.mrb[0].mxu0
        %v2571 = vadd.f32 0.0, %v2570
        %v2572 = vpop.f32.mrb[0].mxu0
        %v2573 = vpop.f32.mrb[0].mxu0
        %v2574 = vadd.f32 0.0, %v2573
        %v2575 = vpop.f32.mrb[0].mxu0
        %2576 = vmatprep.mubr.bf16.mxu0 0
        %2577 = vmatmul.mubr.bf16.gmra.mrb[0].mxu0 %v694
        %v2578 = vpop.f32.mrb[0].mxu0
        %v2579 = vadd.f32 0.0, %v2578
        %v2580 = vpop.f32.mrb[0].mxu0
        %v2581 = vpop.f32.mrb[0].mxu0
        %v2582 = vadd.f32 0.0, %v2581
        %v2583 = vpop.f32.mrb[0].mxu0
        %2584 = vmatprep.mubr.bf16.mxu0 0
        %2585 = vmatmul.mubr.bf16.gmra.mrb[0].mxu0 %v697
        %v2586 = vpop.f32.mrb[0].mxu0
        %v2587 = vadd.f32 0.0, %v2586
        %v2588 = vpop.f32.mrb[0].mxu0
        %v2589 = vpop.f32.mrb[0].mxu0
        %v2590 = vadd.f32 0.0, %v2589
        %v2591 = vpop.f32.mrb[0].mxu0
        %2592 = vmatprep.mubr.bf16.mxu0 0
        %2593 = vmatmul.mubr.bf16.gmra.mrb[0].mxu0 %v700
        %v2594 = vpop.f32.mrb[0].mxu0
        %v2595 = vadd.f32 0.0, %v2594
        %v2596 = vpop.f32.mrb[0].mxu0
        %v2597 = vpop.f32.mrb[0].mxu0
        %v2598 = vadd.f32 0.0, %v2597
        %v2599 = vpop.f32.mrb[0].mxu0
        %2600 = vmatprep.mubr.bf16.mxu0 0
        %2601 = vmatmul.mubr.bf16.gmra.mrb[0].mxu0 %v703
        %v2602 = vpop.f32.mrb[0].mxu0
        %v2603 = vadd.f32 0.0, %v2602
        %v2604 = vpop.f32.mrb[0].mxu0
        %v2605 = vpop.f32.mrb[0].mxu0
        %v2606 = vadd.f32 0.0, %v2605
        %v2607 = vpop.f32.mrb[0].mxu0
        %2608 = vmatprep.mubr.bf16.mxu0 0
        %2609 = vmatmul.mubr.bf16.gmra.mrb[0].mxu0 %v706
        %v2610 = vpop.f32.mrb[0].mxu0
        %v2611 = vadd.f32 0.0, %v2610
        %v2612 = vpop.f32.mrb[0].mxu0
        %v2613 = vpop.f32.mrb[0].mxu0
        %v2614 = vadd.f32 0.0, %v2613
        %v2615 = vpop.f32.mrb[0].mxu0
        %2616 = vmatprep.mubr.bf16.mxu0 0
        %2617 = vmatmul.mubr.bf16.gmra.mrb[0].mxu0 %v709
        %v2618 = vpop.f32.mrb[0].mxu0
        %v2619 = vadd.f32 0.0, %v2618
        %v2620 = vpop.f32.mrb[0].mxu0
        %v2621 = vpop.f32.mrb[0].mxu0
        %v2622 = vadd.f32 0.0, %v2621
        %v2623 = vpop.f32.mrb[0].mxu0
        %2624 = vmatprep.mubr.bf16.mxu0 0
        %2625 = vmatmul.mubr.bf16.gmra.mrb[0].mxu0 %v1829
        %v2626 = vpop.f32.mrb[0].mxu0
        %v2627 = vadd.f32 0.0, %v2626
        %v2628 = vpop.f32.mrb[0].mxu0
        %v2629 = vpop.f32.mrb[0].mxu0
        %v2630 = vadd.f32 0.0, %v2629
        %v2631 = vpop.f32.mrb[0].mxu0
        %2632 = vmatprep.mubr.bf16.mxu0 0
        %2633 = vmatmul.mubr.bf16.gmra.mrb[0].mxu0 %v2475
        %v2634 = vpop.f32.mrb[0].mxu0
        %v2635 = vadd.f32 0.0, %v2634
        %v2636 = vpop.f32.mrb[0].mxu0
        %v2637 = vpop.f32.mrb[0].mxu0
        %v2638 = vadd.f32 0.0, %v2637
        %v2639 = vpop.f32.mrb[0].mxu0
        %2640 = vdwg.mxu0
        %v2641 = vadd.f32 %v2413, %v2515
        %v2642 = vadd.f32 %v2414, %v2518
        %v2643 = vadd.f32 %v2415, %v2523
        %v2644 = vadd.f32 %v2416, %v2526
        %v2645 = vadd.f32 %v2417, %v2531
        %v2646 = vadd.f32 %v2418, %v2534
        %v2647 = vadd.f32 %v2419, %v2539
        %v2648 = vadd.f32 %v2420, %v2542
        %v2649 = vadd.f32 %v2421, %v2547
        %v2650 = vadd.f32 %v2422, %v2550
        %v2651 = vadd.f32 %v2423, %v2555
        %v2652 = vadd.f32 %v2424, %v2558
        %v2653 = vadd.f32 %v2425, %v2563
        %v2654 = vadd.f32 %v2426, %v2566
        %v2655 = vadd.f32 %v2427, %v2571
        %v2656 = vadd.f32 %v2428, %v2574
        %v2657 = vadd.f32 %v2429, %v2579
        %v2658 = vadd.f32 %v2430, %v2582
        %v2659 = vadd.f32 %v2431, %v2587
        %v2660 = vadd.f32 %v2432, %v2590
        %v2661 = vadd.f32 %v2433, %v2595
        %v2662 = vadd.f32 %v2434, %v2598
        %v2663 = vadd.f32 %v2435, %v2603
        %v2664 = vadd.f32 %v2436, %v2606
        %v2665 = vadd.f32 %v2437, %v2611
        %v2666 = vadd.f32 %v2438, %v2614
        %v2667 = vadd.f32 %v2439, %v2619
        %v2668 = vadd.f32 %v2440, %v2622
        %v2669 = vadd.f32 %v2441, %v2627
        %v2670 = vadd.f32 %v2442, %v2630
        %v2671 = vadd.f32 %v2443, %v2635
        %v2672 = vadd.f32 %v2444, %v2638
        %v2674 = vrot.slane %v221, 5
        %v2675 = vrot.slane %v2674, 4
        %v2676 = vrot.slane %v222, 5
        %v2677 = vsel %vm1186, %v2675, %v2676
        %v2678 = vrot.slane %v2676, 4
        %v2679 = vrot.slane %v223, 5
        %v2680 = vsel %vm1186, %v2678, %v2679
        %s2681 = scalar_lea.vmem %s1, 32
        %v2682 = vld [vmem:[%s2681] sm:$0xf]
        %v2683 = vunpack.c.l.b16 %v2677
        %v2684 = vunpack.c.l.b16 %v2680
        %v2685 = vpack.c.b16 %v2684, %v2683
        %v2687 = vsel %vm662, %v2685, 0
        %v2690 = vsel %vm711, %v2682, 0
        %2692 = vmatprep.subr.bf16.mxu0 0
        %2693 = vmatpush1.bf16.msra.mxu0 %v2690
        %2694 = vmatprep.subr.bf16.mxu0 0
        %2695 = vmatpush1.bf16.msra.mxu0 0
        %2696 = vmatprep.subr.bf16.mxu0 0
        %2697 = vmatpush1.bf16.msra.mxu0 0
        %2698 = vmatprep.subr.bf16.mxu0 0
        %2699 = vmatpush1.bf16.msra.mxu0 0
        %2700 = vmatprep.subr.bf16.mxu0 0
        %2701 = vmatpush1.bf16.msra.mxu0 0
        %2702 = vmatprep.subr.bf16.mxu0 0
        %2703 = vmatpush1.bf16.msra.mxu0 0
        %2704 = vmatprep.subr.bf16.mxu0 0
        %2705 = vmatpush1.bf16.msra.mxu0 0
        %2706 = vmatprep.subr.bf16.mxu0 0
        %2707 = vmatpush1.bf16.msra.mxu0 0
        %2708 = vmatprep.subr.bf16.mxu0 0
        %2709 = vmatpush1.bf16.msra.mxu0 0
        %2710 = vmatprep.subr.bf16.mxu0 0
        %2711 = vmatpush1.bf16.msra.mxu0 0
        %2712 = vmatprep.subr.bf16.mxu0 0
        %2713 = vmatpush1.bf16.msra.mxu0 0
        %2714 = vmatprep.subr.bf16.mxu0 0
        %2715 = vmatpush1.bf16.msra.mxu0 0
        %2716 = vmatprep.subr.bf16.mxu0 0
        %2717 = vmatpush1.bf16.msra.mxu0 0
        %2718 = vmatprep.subr.bf16.mxu0 0
        %2719 = vmatpush1.bf16.msra.mxu0 0
        %2720 = vmatprep.subr.bf16.mxu0 0
        %2721 = vmatpush1.bf16.msra.mxu0 0
        %2722 = vmatprep.subr.bf16.mxu0 0
        %2723 = vmatpush1.bf16.msra.mxu0 0
        %2724 = vmatprep.mubr.bf16.mxu0 0
        %2725 = vmatmul.mubr.bf16.gmra.mrb[0].mxu0 %v1356
        %v2726 = vpop.f32.mrb[0].mxu0
        %v2727 = vadd.f32 0.0, %v2726
        %v2728 = vpop.f32.mrb[0].mxu0
        %v2729 = vpop.f32.mrb[0].mxu0
        %v2730 = vadd.f32 0.0, %v2729
        %v2731 = vpop.f32.mrb[0].mxu0
        %2732 = vmatprep.mubr.bf16.mxu0 0
        %2733 = vmatmul.mubr.bf16.gmra.mrb[0].mxu0 %v1359
        %v2734 = vpop.f32.mrb[0].mxu0
        %v2735 = vadd.f32 0.0, %v2734
        %v2736 = vpop.f32.mrb[0].mxu0
        %v2737 = vpop.f32.mrb[0].mxu0
        %v2738 = vadd.f32 0.0, %v2737
        %v2739 = vpop.f32.mrb[0].mxu0
        %2740 = vmatprep.mubr.bf16.mxu0 0
        %2741 = vmatmul.mubr.bf16.gmra.mrb[0].mxu0 %v1362
        %v2742 = vpop.f32.mrb[0].mxu0
        %v2743 = vadd.f32 0.0, %v2742
        %v2744 = vpop.f32.mrb[0].mxu0
        %v2745 = vpop.f32.mrb[0].mxu0
        %v2746 = vadd.f32 0.0, %v2745
        %v2747 = vpop.f32.mrb[0].mxu0
        %2748 = vmatprep.mubr.bf16.mxu0 0
        %2749 = vmatmul.mubr.bf16.gmra.mrb[0].mxu0 %v1365
        %v2750 = vpop.f32.mrb[0].mxu0
        %v2751 = vadd.f32 0.0, %v2750
        %v2752 = vpop.f32.mrb[0].mxu0
        %v2753 = vpop.f32.mrb[0].mxu0
        %v2754 = vadd.f32 0.0, %v2753
        %v2755 = vpop.f32.mrb[0].mxu0
        %2756 = vmatprep.mubr.bf16.mxu0 0
        %2757 = vmatmul.mubr.bf16.gmra.mrb[0].mxu0 %v1368
        %v2758 = vpop.f32.mrb[0].mxu0
        %v2759 = vadd.f32 0.0, %v2758
        %v2760 = vpop.f32.mrb[0].mxu0
        %v2761 = vpop.f32.mrb[0].mxu0
        %v2762 = vadd.f32 0.0, %v2761
        %v2763 = vpop.f32.mrb[0].mxu0
        %2764 = vmatprep.mubr.bf16.mxu0 0
        %2765 = vmatmul.mubr.bf16.gmra.mrb[0].mxu0 %v1371
        %v2766 = vpop.f32.mrb[0].mxu0
        %v2767 = vadd.f32 0.0, %v2766
        %v2768 = vpop.f32.mrb[0].mxu0
        %v2769 = vpop.f32.mrb[0].mxu0
        %v2770 = vadd.f32 0.0, %v2769
        %v2771 = vpop.f32.mrb[0].mxu0
        %2772 = vmatprep.mubr.bf16.mxu0 0
        %2773 = vmatmul.mubr.bf16.gmra.mrb[0].mxu0 %v1374
        %v2774 = vpop.f32.mrb[0].mxu0
        %v2775 = vadd.f32 0.0, %v2774
        %v2776 = vpop.f32.mrb[0].mxu0
        %v2777 = vpop.f32.mrb[0].mxu0
        %v2778 = vadd.f32 0.0, %v2777
        %v2779 = vpop.f32.mrb[0].mxu0
        %2780 = vmatprep.mubr.bf16.mxu0 0
        %2781 = vmatmul.mubr.bf16.gmra.mrb[0].mxu0 %v1377
        %v2782 = vpop.f32.mrb[0].mxu0
        %v2783 = vadd.f32 0.0, %v2782
        %v2784 = vpop.f32.mrb[0].mxu0
        %v2785 = vpop.f32.mrb[0].mxu0
        %v2786 = vadd.f32 0.0, %v2785
        %v2787 = vpop.f32.mrb[0].mxu0
        %2788 = vmatprep.mubr.bf16.mxu0 0
        %2789 = vmatmul.mubr.bf16.gmra.mrb[0].mxu0 %v1380
        %v2790 = vpop.f32.mrb[0].mxu0
        %v2791 = vadd.f32 0.0, %v2790
        %v2792 = vpop.f32.mrb[0].mxu0
        %v2793 = vpop.f32.mrb[0].mxu0
        %v2794 = vadd.f32 0.0, %v2793
        %v2795 = vpop.f32.mrb[0].mxu0
        %2796 = vmatprep.mubr.bf16.mxu0 0
        %2797 = vmatmul.mubr.bf16.gmra.mrb[0].mxu0 %v1383
        %v2798 = vpop.f32.mrb[0].mxu0
        %v2799 = vadd.f32 0.0, %v2798
        %v2800 = vpop.f32.mrb[0].mxu0
        %v2801 = vpop.f32.mrb[0].mxu0
        %v2802 = vadd.f32 0.0, %v2801
        %v2803 = vpop.f32.mrb[0].mxu0
        %2804 = vmatprep.mubr.bf16.mxu0 0
        %2805 = vmatmul.mubr.bf16.gmra.mrb[0].mxu0 %v1386
        %v2806 = vpop.f32.mrb[0].mxu0
        %v2807 = vadd.f32 0.0, %v2806
        %v2808 = vpop.f32.mrb[0].mxu0
        %v2809 = vpop.f32.mrb[0].mxu0
        %v2810 = vadd.f32 0.0, %v2809
        %v2811 = vpop.f32.mrb[0].mxu0
        %2812 = vmatprep.mubr.bf16.mxu0 0
        %2813 = vmatmul.mubr.bf16.gmra.mrb[0].mxu0 %v1389
        %v2814 = vpop.f32.mrb[0].mxu0
        %v2815 = vadd.f32 0.0, %v2814
        %v2816 = vpop.f32.mrb[0].mxu0
        %v2817 = vpop.f32.mrb[0].mxu0
        %v2818 = vadd.f32 0.0, %v2817
        %v2819 = vpop.f32.mrb[0].mxu0
        %2820 = vmatprep.mubr.bf16.mxu0 0
        %2821 = vmatmul.mubr.bf16.gmra.mrb[0].mxu0 %v1392
        %v2822 = vpop.f32.mrb[0].mxu0
        %v2823 = vadd.f32 0.0, %v2822
        %v2824 = vpop.f32.mrb[0].mxu0
        %v2825 = vpop.f32.mrb[0].mxu0
        %v2826 = vadd.f32 0.0, %v2825
        %v2827 = vpop.f32.mrb[0].mxu0
        %2828 = vmatprep.mubr.bf16.mxu0 0
        %2829 = vmatmul.mubr.bf16.gmra.mrb[0].mxu0 %v1395
        %v2830 = vpop.f32.mrb[0].mxu0
        %v2831 = vadd.f32 0.0, %v2830
        %v2832 = vpop.f32.mrb[0].mxu0
        %v2833 = vpop.f32.mrb[0].mxu0
        %v2834 = vadd.f32 0.0, %v2833
        %v2835 = vpop.f32.mrb[0].mxu0
        %2836 = vmatprep.mubr.bf16.mxu0 0
        %2837 = vmatmul.mubr.bf16.gmra.mrb[0].mxu0 %v2041
        %v2838 = vpop.f32.mrb[0].mxu0
        %v2839 = vadd.f32 0.0, %v2838
        %v2840 = vpop.f32.mrb[0].mxu0
        %v2841 = vpop.f32.mrb[0].mxu0
        %v2842 = vadd.f32 0.0, %v2841
        %v2843 = vpop.f32.mrb[0].mxu0
        %2844 = vmatprep.mubr.bf16.mxu0 0
        %2845 = vmatmul.mubr.bf16.gmra.mrb[0].mxu0 %v2687
        %v2846 = vpop.f32.mrb[0].mxu0
        %v2847 = vadd.f32 0.0, %v2846
        %v2848 = vpop.f32.mrb[0].mxu0
        %v2849 = vpop.f32.mrb[0].mxu0
        %v2850 = vadd.f32 0.0, %v2849
        %v2851 = vpop.f32.mrb[0].mxu0
        %2852 = vdwg.mxu0
        %v2853 = vadd.f32 %v2641, %v2727
        %v2854 = vadd.f32 %v2642, %v2730
        %v2855 = vadd.f32 %v2643, %v2735
        %v2856 = vadd.f32 %v2644, %v2738
        %v2857 = vadd.f32 %v2645, %v2743
        %v2858 = vadd.f32 %v2646, %v2746
        %v2859 = vadd.f32 %v2647, %v2751
        %v2860 = vadd.f32 %v2648, %v2754
        %v2861 = vadd.f32 %v2649, %v2759
        %v2862 = vadd.f32 %v2650, %v2762
        %v2863 = vadd.f32 %v2651, %v2767
        %v2864 = vadd.f32 %v2652, %v2770
        %v2865 = vadd.f32 %v2653, %v2775
        %v2866 = vadd.f32 %v2654, %v2778
        %v2867 = vadd.f32 %v2655, %v2783
        %v2868 = vadd.f32 %v2656, %v2786
        %v2869 = vadd.f32 %v2657, %v2791
        %v2870 = vadd.f32 %v2658, %v2794
        %v2871 = vadd.f32 %v2659, %v2799
        %v2872 = vadd.f32 %v2660, %v2802
        %v2873 = vadd.f32 %v2661, %v2807
        %v2874 = vadd.f32 %v2662, %v2810
        %v2875 = vadd.f32 %v2663, %v2815
        %v2876 = vadd.f32 %v2664, %v2818
        %v2877 = vadd.f32 %v2665, %v2823
        %v2878 = vadd.f32 %v2666, %v2826
        %v2879 = vadd.f32 %v2667, %v2831
        %v2880 = vadd.f32 %v2668, %v2834
        %v2881 = vadd.f32 %v2669, %v2839
        %v2882 = vadd.f32 %v2670, %v2842
        %v2883 = vadd.f32 %v2671, %v2847
        %v2884 = vadd.f32 %v2672, %v2850
        %v2885 = vld [vmem:[%s2] sm:$0x1]
        %v2887 = vlaneseq
        %v2888 = vshrl.u32 %v2887, 7
        %v2889 = vsub.s32 0, %v2888
        %v2890 = vrot.slane %v2885, %v2889
        %v2892 = vadd.f32 %v2853, %v2890
        %v2893 = vadd.f32 %v2854, %v2890
        %v2894 = vadd.f32 %v2855, %v2890
        %v2895 = vadd.f32 %v2856, %v2890
        %v2896 = vadd.f32 %v2857, %v2890
        %v2897 = vadd.f32 %v2858, %v2890
        %v2898 = vadd.f32 %v2859, %v2890
        %v2899 = vadd.f32 %v2860, %v2890
        %v2900 = vadd.f32 %v2861, %v2890
        %v2901 = vadd.f32 %v2862, %v2890
        %v2902 = vadd.f32 %v2863, %v2890
        %v2903 = vadd.f32 %v2864, %v2890
        %v2904 = vadd.f32 %v2865, %v2890
        %v2905 = vadd.f32 %v2866, %v2890
        %v2906 = vadd.f32 %v2867, %v2890
        %v2907 = vadd.f32 %v2868, %v2890
        %v2908 = vadd.f32 %v2869, %v2890
        %v2909 = vadd.f32 %v2870, %v2890
        %v2910 = vadd.f32 %v2871, %v2890
        %v2911 = vadd.f32 %v2872, %v2890
        %v2912 = vadd.f32 %v2873, %v2890
        %v2913 = vadd.f32 %v2874, %v2890
        %v2914 = vadd.f32 %v2875, %v2890
        %v2915 = vadd.f32 %v2876, %v2890
        %v2916 = vadd.f32 %v2877, %v2890
        %v2917 = vadd.f32 %v2878, %v2890
        %v2918 = vadd.f32 %v2879, %v2890
        %v2919 = vadd.f32 %v2880, %v2890
        %v2920 = vadd.f32 %v2881, %v2890
        %v2921 = vadd.f32 %v2882, %v2890
        %v2922 = vadd.f32 %v2883, %v2890
        %v2923 = vadd.f32 %v2884, %v2890
        %v2924 = vxor.u32 %v2892, 2147483648
        %v2925 = vxor.u32 %v2893, 2147483648
        %v2926 = vxor.u32 %v2894, 2147483648
        %v2927 = vxor.u32 %v2895, 2147483648
        %v2928 = vxor.u32 %v2896, 2147483648
        %v2929 = vxor.u32 %v2897, 2147483648
        %v2930 = vxor.u32 %v2898, 2147483648
        %v2931 = vxor.u32 %v2899, 2147483648
        %v2932 = vxor.u32 %v2900, 2147483648
        %v2933 = vxor.u32 %v2901, 2147483648
        %v2934 = vxor.u32 %v2902, 2147483648
        %v2935 = vxor.u32 %v2903, 2147483648
        %v2936 = vxor.u32 %v2904, 2147483648
        %v2937 = vxor.u32 %v2905, 2147483648
        %v2938 = vxor.u32 %v2906, 2147483648
        %v2939 = vxor.u32 %v2907, 2147483648
        %v2940 = vxor.u32 %v2908, 2147483648
        %v2941 = vxor.u32 %v2909, 2147483648
        %v2942 = vxor.u32 %v2910, 2147483648
        %v2943 = vxor.u32 %v2911, 2147483648
        %v2944 = vxor.u32 %v2912, 2147483648
        %v2945 = vxor.u32 %v2913, 2147483648
        %v2946 = vxor.u32 %v2914, 2147483648
        %v2947 = vxor.u32 %v2915, 2147483648
        %v2948 = vxor.u32 %v2916, 2147483648
        %v2949 = vxor.u32 %v2917, 2147483648
        %v2950 = vxor.u32 %v2918, 2147483648
        %v2951 = vxor.u32 %v2919, 2147483648
        %v2952 = vxor.u32 %v2920, 2147483648
        %v2953 = vxor.u32 %v2921, 2147483648
        %v2954 = vxor.u32 %v2922, 2147483648
        %v2955 = vxor.u32 %v2923, 2147483648
        %v2956 = vmul.f32 %v2924, 1.442695
        %v2957 = vpow.pop %v2956
        %v2958 = vmul.f32 %v2925, 1.442695
        %v2959 = vpow.pop %v2958
        %v2960 = vmul.f32 %v2926, 1.442695
        %v2961 = vpow.pop %v2960
        %v2962 = vmul.f32 %v2927, 1.442695
        %v2963 = vpow.pop %v2962
        %v2964 = vmul.f32 %v2928, 1.442695
        %v2965 = vpow.pop %v2964
        %v2966 = vmul.f32 %v2929, 1.442695
        %v2967 = vpow.pop %v2966
        %v2968 = vmul.f32 %v2930, 1.442695
        %v2969 = vpow.pop %v2968
        %v2970 = vmul.f32 %v2931, 1.442695
        %v2971 = vpow.pop %v2970
        %v2972 = vmul.f32 %v2932, 1.442695
        %v2973 = vpow.pop %v2972
        %v2974 = vmul.f32 %v2933, 1.442695
        %v2975 = vpow.pop %v2974
        %v2976 = vmul.f32 %v2934, 1.442695
        %v2977 = vpow.pop %v2976
        %v2978 = vmul.f32 %v2935, 1.442695
        %v2979 = vpow.pop %v2978
        %v2980 = vmul.f32 %v2936, 1.442695
        %v2981 = vpow.pop %v2980
        %v2982 = vmul.f32 %v2937, 1.442695
        %v2983 = vpow.pop %v2982
        %v2984 = vmul.f32 %v2938, 1.442695
        %v2985 = vpow.pop %v2984
        %v2986 = vmul.f32 %v2939, 1.442695
        %v2987 = vpow.pop %v2986
        %v2988 = vmul.f32 %v2940, 1.442695
        %v2989 = vpow.pop %v2988
        %v2990 = vmul.f32 %v2941, 1.442695
        %v2991 = vpow.pop %v2990
        %v2992 = vmul.f32 %v2942, 1.442695
        %v2993 = vpow.pop %v2992
        %v2994 = vmul.f32 %v2943, 1.442695
        %v2995 = vpow.pop %v2994
        %v2996 = vmul.f32 %v2944, 1.442695
        %v2997 = vpow.pop %v2996
        %v2998 = vmul.f32 %v2945, 1.442695
        %v2999 = vpow.pop %v2998
        %v3000 = vmul.f32 %v2946, 1.442695
        %v3001 = vpow.pop %v3000
        %v3002 = vmul.f32 %v2947, 1.442695
        %v3003 = vpow.pop %v3002
        %v3004 = vmul.f32 %v2948, 1.442695
        %v3005 = vpow.pop %v3004
        %v3006 = vmul.f32 %v2949, 1.442695
        %v3007 = vpow.pop %v3006
        %v3008 = vmul.f32 %v2950, 1.442695
        %v3009 = vpow.pop %v3008
        %v3010 = vmul.f32 %v2951, 1.442695
        %v3011 = vpow.pop %v3010
        %v3012 = vmul.f32 %v2952, 1.442695
        %v3013 = vpow.pop %v3012
        %v3014 = vmul.f32 %v2953, 1.442695
        %v3015 = vpow.pop %v3014
        %v3016 = vmul.f32 %v2954, 1.442695
        %v3017 = vpow.pop %v3016
        %v3018 = vmul.f32 %v2955, 1.442695
        %v3019 = vpow.pop %v3018
        %v3020 = vadd.f32 %v2957, 1.0
        %v3021 = vadd.f32 %v2959, 1.0
        %v3022 = vadd.f32 %v2961, 1.0
        %v3023 = vadd.f32 %v2963, 1.0
        %v3024 = vadd.f32 %v2965, 1.0
        %v3025 = vadd.f32 %v2967, 1.0
        %v3026 = vadd.f32 %v2969, 1.0
        %v3027 = vadd.f32 %v2971, 1.0
        %v3028 = vadd.f32 %v2973, 1.0
        %v3029 = vadd.f32 %v2975, 1.0
        %v3030 = vadd.f32 %v2977, 1.0
        %v3031 = vadd.f32 %v2979, 1.0
        %v3032 = vadd.f32 %v2981, 1.0
        %v3033 = vadd.f32 %v2983, 1.0
        %v3034 = vadd.f32 %v2985, 1.0
        %v3035 = vadd.f32 %v2987, 1.0
        %v3036 = vadd.f32 %v2989, 1.0
        %v3037 = vadd.f32 %v2991, 1.0
        %v3038 = vadd.f32 %v2993, 1.0
        %v3039 = vadd.f32 %v2995, 1.0
        %v3040 = vadd.f32 %v2997, 1.0
        %v3041 = vadd.f32 %v2999, 1.0
        %v3042 = vadd.f32 %v3001, 1.0
        %v3043 = vadd.f32 %v3003, 1.0
        %v3044 = vadd.f32 %v3005, 1.0
        %v3045 = vadd.f32 %v3007, 1.0
        %v3046 = vadd.f32 %v3009, 1.0
        %v3047 = vadd.f32 %v3011, 1.0
        %v3048 = vadd.f32 %v3013, 1.0
        %v3049 = vadd.f32 %v3015, 1.0
        %v3050 = vadd.f32 %v3017, 1.0
        %v3051 = vadd.f32 %v3019, 1.0
        %v3052 = vrcp.pop %v3020
        %v3053 = vmul.f32 1.0, %v3052
        %v3054 = vrcp.pop %v3021
        %v3055 = vmul.f32 1.0, %v3054
        %v3056 = vrcp.pop %v3022
        %v3057 = vmul.f32 1.0, %v3056
        %v3058 = vrcp.pop %v3023
        %v3059 = vmul.f32 1.0, %v3058
        %v3060 = vrcp.pop %v3024
        %v3061 = vmul.f32 1.0, %v3060
        %v3062 = vrcp.pop %v3025
        %v3063 = vmul.f32 1.0, %v3062
        %v3064 = vrcp.pop %v3026
        %v3065 = vmul.f32 1.0, %v3064
        %v3066 = vrcp.pop %v3027
        %v3067 = vmul.f32 1.0, %v3066
        %v3068 = vrcp.pop %v3028
        %v3069 = vmul.f32 1.0, %v3068
        %v3070 = vrcp.pop %v3029
        %v3071 = vmul.f32 1.0, %v3070
        %v3072 = vrcp.pop %v3030
        %v3073 = vmul.f32 1.0, %v3072
        %v3074 = vrcp.pop %v3031
        %v3075 = vmul.f32 1.0, %v3074
        %v3076 = vrcp.pop %v3032
        %v3077 = vmul.f32 1.0, %v3076
        %v3078 = vrcp.pop %v3033
        %v3079 = vmul.f32 1.0, %v3078
        %v3080 = vrcp.pop %v3034
        %v3081 = vmul.f32 1.0, %v3080
        %v3082 = vrcp.pop %v3035
        %v3083 = vmul.f32 1.0, %v3082
        %v3084 = vrcp.pop %v3036
        %v3085 = vmul.f32 1.0, %v3084
        %v3086 = vrcp.pop %v3037
        %v3087 = vmul.f32 1.0, %v3086
        %v3088 = vrcp.pop %v3038
        %v3089 = vmul.f32 1.0, %v3088
        %v3090 = vrcp.pop %v3039
        %v3091 = vmul.f32 1.0, %v3090
        %v3092 = vrcp.pop %v3040
        %v3093 = vmul.f32 1.0, %v3092
        %v3094 = vrcp.pop %v3041
        %v3095 = vmul.f32 1.0, %v3094
        %v3096 = vrcp.pop %v3042
        %v3097 = vmul.f32 1.0, %v3096
        %v3098 = vrcp.pop %v3043
        %v3099 = vmul.f32 1.0, %v3098
        %v3100 = vrcp.pop %v3044
        %v3101 = vmul.f32 1.0, %v3100
        %v3102 = vrcp.pop %v3045
        %v3103 = vmul.f32 1.0, %v3102
        %v3104 = vrcp.pop %v3046
        %v3105 = vmul.f32 1.0, %v3104
        %v3106 = vrcp.pop %v3047
        %v3107 = vmul.f32 1.0, %v3106
        %v3108 = vrcp.pop %v3048
        %v3109 = vmul.f32 1.0, %v3108
        %v3110 = vrcp.pop %v3049
        %v3111 = vmul.f32 1.0, %v3110
        %v3112 = vrcp.pop %v3050
        %v3113 = vmul.f32 1.0, %v3112
        %v3114 = vrcp.pop %v3051
        %v3115 = vmul.f32 1.0, %v3114
        %v3116 = vmul.f32 %v2892, %v3053
        %v3117 = vmul.f32 %v2893, %v3055
        %v3118 = vmul.f32 %v2894, %v3057
        %v3119 = vmul.f32 %v2895, %v3059
        %v3120 = vmul.f32 %v2896, %v3061
        %v3121 = vmul.f32 %v2897, %v3063
        %v3122 = vmul.f32 %v2898, %v3065
        %v3123 = vmul.f32 %v2899, %v3067
        %v3124 = vmul.f32 %v2900, %v3069
        %v3125 = vmul.f32 %v2901, %v3071
        %v3126 = vmul.f32 %v2902, %v3073
        %v3127 = vmul.f32 %v2903, %v3075
        %v3128 = vmul.f32 %v2904, %v3077
        %v3129 = vmul.f32 %v2905, %v3079
        %v3130 = vmul.f32 %v2906, %v3081
        %v3131 = vmul.f32 %v2907, %v3083
        %v3132 = vmul.f32 %v2908, %v3085
        %v3133 = vmul.f32 %v2909, %v3087
        %v3134 = vmul.f32 %v2910, %v3089
        %v3135 = vmul.f32 %v2911, %v3091
        %v3136 = vmul.f32 %v2912, %v3093
        %v3137 = vmul.f32 %v2913, %v3095
        %v3138 = vmul.f32 %v2914, %v3097
        %v3139 = vmul.f32 %v2915, %v3099
        %v3140 = vmul.f32 %v2916, %v3101
        %v3141 = vmul.f32 %v2917, %v3103
        %v3142 = vmul.f32 %v2918, %v3105
        %v3143 = vmul.f32 %v2919, %v3107
        %v3144 = vmul.f32 %v2920, %v3109
        %v3145 = vmul.f32 %v2921, %v3111
        %v3146 = vmul.f32 %v2922, %v3113
        %v3147 = vmul.f32 %v2923, %v3115
        %3148 = vst [vmem:[%s163] sm:$0xff] %v3116
        %3149 = vst [vmem:[%s163 + $0x8] sm:$0xff] %v3117
        %3150 = vst [vmem:[%s163 + $0x10] sm:$0xff] %v3118
        %3151 = vst [vmem:[%s163 + $0x18] sm:$0xff] %v3119
        %3152 = vst [vmem:[%s163 + $0x20] sm:$0xff] %v3120
        %3153 = vst [vmem:[%s163 + $0x28] sm:$0xff] %v3121
        %3154 = vst [vmem:[%s163 + $0x30] sm:$0xff] %v3122
        %3155 = vst [vmem:[%s163 + $0x38] sm:$0xff] %v3123
        %3156 = vst [vmem:[%s163 + $0x40] sm:$0xff] %v3124
        %3157 = vst [vmem:[%s163 + $0x48] sm:$0xff] %v3125
        %3158 = vst [vmem:[%s163 + $0x50] sm:$0xff] %v3126
        %3159 = vst [vmem:[%s163 + $0x58] sm:$0xff] %v3127
        %3160 = vst [vmem:[%s163 + $0x60] sm:$0xff] %v3128
        %3161 = vst [vmem:[%s163 + $0x68] sm:$0xff] %v3129
        %3162 = vst [vmem:[%s163 + $0x70] sm:$0xff] %v3130
        %3163 = vst [vmem:[%s163 + $0x78] sm:$0xff] %v3131
        %3164 = vst [vmem:[%s163 + $0x80] sm:$0xff] %v3132
        %3165 = vst [vmem:[%s163 + $0x88] sm:$0xff] %v3133
        %3166 = vst [vmem:[%s163 + $0x90] sm:$0xff] %v3134
        %3167 = vst [vmem:[%s163 + $0x98] sm:$0xff] %v3135
        %3168 = vst [vmem:[%s163 + $0xa0] sm:$0xff] %v3136
        %3169 = vst [vmem:[%s163 + $0xa8] sm:$0xff] %v3137
        %3170 = vst [vmem:[%s163 + $0xb0] sm:$0xff] %v3138
        %3171 = vst [vmem:[%s163 + $0xb8] sm:$0xff] %v3139
        %3172 = vst [vmem:[%s163 + $0xc0] sm:$0xff] %v3140
        %3173 = vst [vmem:[%s163 + $0xc8] sm:$0xff] %v3141
        %3174 = vst [vmem:[%s163 + $0xd0] sm:$0xff] %v3142
        %3175 = vst [vmem:[%s163 + $0xd8] sm:$0xff] %v3143
        %3176 = vst [vmem:[%s163 + $0xe0] sm:$0xff] %v3144
        %3177 = vst [vmem:[%s163 + $0xe8] sm:$0xff] %v3145
        %3178 = vst [vmem:[%s163 + $0xf0] sm:$0xff] %v3146
        %3179 = vst [vmem:[%s163 + $0xf8] sm:$0xff] %v3147
        %s3180 = sand.u32 %s93, 1
        %s3181 = scalar_lea.sflag [#allocation3], %s3180
        %s3182 = sand.u32 %s93, 1
        %s3183 = smul.addr %s3182, 256
        %s3184 = scalar_lea.vmem [#allocation2], %s3183
        // Predicated region
        $region33: #{tpu_custom_call.1} parent=31 // pred_check
          %p3185 = pneg %p103
        $region34: #{tpu_custom_call.1} parent=31 // pred_check_branch
          %3187 = sbr.rel (%p3185) target = $region36
        $region35: #{tpu_custom_call.1} parent=31 // pred_region
          %s3189 = ssub.s32 4096, 4096
          %3190 = vsyncadd %s3181, %s3189
          %s3191 = smul.addr %s17, 32
          %s3192 = smul.addr %s3191, 128
          %s3193 = scalar_lea.hbm %s3, %s3192
          %s3194 = sshll.u32 %s3184, 4
          %s3195 = int_to_ptr.vmem [resolvable:$true] %s3194
          %3200 = dma.vmem_to_hbm [thread:$0]  %s3195, 4096, %s3193, %s3181, 128, 128, 8
        $region36: #{tpu_custom_call.1} parent=31 // pred_fallthru
          _
      $region32: #{tpu_custom_call.1} parent=5 // pred_fallthru
        _
      %p3201 = scmp.le.s32.totalorder 2, %s12
      // Predicated region
      $region37: #{tpu_custom_call.1} parent=5 // pred_check
        %p3202 = pneg %p3201
      $region38: #{tpu_custom_call.1} parent=5 // pred_check_branch
        %3204 = sbr.rel (%p3202) target = $region40
      $region39: #{tpu_custom_call.1} parent=5 // pred_region
        %s3205 = ssub.s32 %s12, 2
        // Predicated region
        $region41: #{tpu_custom_call.1} parent=39 // pred_check
          %p3206 = pneg %p109
        $region42: #{tpu_custom_call.1} parent=39 // pred_check_branch
          %3208 = sbr.rel (%p3206) target = $region44
        $region43: #{tpu_custom_call.1} parent=39 // pred_region
          %s3209 = sand.u32 %s94, 1
          %s3210 = scalar_lea.sflag [#allocation3], %s3209
          %s3211 = sand.u32 %s94, 1
          %s3212 = smul.addr %s3211, 256
          %s3213 = scalar_lea.vmem [#allocation2], %s3212
          %3214 = dma.done %s3210, 4096
        $region44: #{tpu_custom_call.1} parent=39 // pred_fallthru
          _
      $region40: #{tpu_custom_call.1} parent=5 // pred_fallthru
        _
    $region6: #{tpu_custom_call.1} parent=1 // loop_footer
      %s16 = sadd.s32 1, %s12
    $region7: #{tpu_custom_call.1} parent=1 // loop_footer_branch
      %11 = sbr.rel target = $region3
    $region8: #{tpu_custom_call.1} parent=1 // loop_exit
      _
    %3215 = vsyncpa [#allocation3], 1
    %s3216 = scalar_lea.sflag [#allocation3], 1
    %3217 = vsyncpa %s3216, 1

</llo_original>
